<compile_context>
chip_gen: v5e
topology: v5e:2x2
jax: 0.10.0
libtpu: 0.0.40
codegen_flags: <defaults>
</compile_context>

<pallas_src>
import functools

import jax
import jax.numpy as jnp
from jax.experimental import pallas as pl
from jax.experimental.pallas import tpu as pltpu

MAX_N_TILE = 512          # rows per encoder N tile (cap)
MAX_K_TILE = 2048         # contraction tile (cap)
ENC_VMEM_BUDGET = 24 << 20   # double-buffered working-set budget (safe on v7x)
HEAD_VMEM_LIMIT = 32 << 20


def _round_up(x, m):
    return ((x + m - 1) // m) * m


def _k_tiling(k_dim, max_tile):
    """Pad K only to 128; tile = largest 128-multiple divisor <= max_tile."""
    k_pad = _round_up(k_dim, 128)
    n128 = k_pad // 128
    best = 128
    for t in range(1, n128 + 1):
        if n128 % t == 0 and t * 128 <= max_tile:
            best = t * 128
    return k_pad, best, k_pad // best


def _enc_vmem_estimate(tn, tkv, tka, fv_pad, f_pad):
    # all four inputs stay live through both phases (clamped index maps),
    # each double-buffered; bf16 output double-buffered; f32 accumulator.
    in_bytes = (tn * tkv * 2 + tn * tka * 2
                + tkv * fv_pad * 2 + tka * (f_pad - fv_pad) * 2 + f_pad * 4)
    out_bytes = tn * f_pad * 2
    acc_bytes = tn * f_pad * 4
    return 2 * (in_bytes + out_bytes) + acc_bytes


def _choose_tiles(N, Kv, Ka, fv_pad, f_pad, budget=ENC_VMEM_BUDGET):
    tn = min(MAX_N_TILE, _round_up(N, 16))
    max_k = MAX_K_TILE
    while True:
        kv = _k_tiling(Kv, max_k)
        ka = _k_tiling(Ka, max_k)
        est = _enc_vmem_estimate(tn, kv[1], ka[1], fv_pad, f_pad)
        if est <= budget or (max_k <= 128 and tn <= 64):
            break
        if max_k > 128:
            max_k //= 2
        else:
            tn = max(64, tn // 2)
    vmem_limit = min(max(2 * est, 16 << 20), 48 << 20)
    return tn, kv, ka, vmem_limit


# ----------------------------------------------------------------------------
# Kernel 1: fused video+audio encoder matmul -> (N_pad, F_pad) bf16 slab
#   grid = (N_tiles, Kv_tiles + Ka_tiles); K axis does video tiles then audio.
#   f32 accumulator in VMEM (init = broadcast bias), bf16 cast at finalize.
# ----------------------------------------------------------------------------
def _encoder_kernel(kv_tiles, xv_ref, xa_ref, wv_ref, wa_ref, b_ref,
                    o_ref, acc_ref):
    k = pl.program_id(1)
    nk = pl.num_programs(1)
    fv_pad = wv_ref.shape[1]          # static

    @pl.when(k == 0)
    def _init():
        # bias folded into accumulator init (no finalize add)
        acc_ref[...] = jnp.broadcast_to(b_ref[...], acc_ref.shape)

    @pl.when(k < kv_tiles)
    def _video():
        acc_ref[:, :fv_pad] += jnp.dot(
            xv_ref[...], wv_ref[...], preferred_element_type=jnp.float32)

    @pl.when(k >= kv_tiles)
    def _audio():
        acc_ref[:, fv_pad:] += jnp.dot(
            xa_ref[...], wa_ref[...], preferred_element_type=jnp.float32)

    @pl.when(k == nk - 1)
    def _finalize():
        o_ref[...] = acc_ref[...].astype(o_ref.dtype)


def pallas_fused_encoder(xv, xa, wv, wa, bias, *, tn, tkv, tka,
                         kv_tiles, ka_tiles, fv_pad, f_pad, vmem_limit):
    n_pad = xv.shape[0]
    n_tiles = n_pad // tn
    k_steps = kv_tiles + ka_tiles
    kern = functools.partial(_encoder_kernel, kv_tiles)

    # clamped index maps: each K tile is DMA'd exactly once.
    def xv_map(i, k):
        return (i, jnp.minimum(k, kv_tiles - 1))

    def xa_map(i, k):
        return (i, jnp.maximum(k - kv_tiles, 0))

    def wv_map(i, k):
        return (jnp.minimum(k, kv_tiles - 1), 0)

    def wa_map(i, k):
        return (jnp.maximum(k - kv_tiles, 0), 0)

    return pl.pallas_call(
        kern,
        out_shape=jax.ShapeDtypeStruct((n_pad, f_pad), jnp.bfloat16),
        grid_spec=pltpu.PrefetchScalarGridSpec(
            num_scalar_prefetch=0,
            grid=(n_tiles, k_steps),
            in_specs=[
                pl.BlockSpec((tn, tkv), xv_map),
                pl.BlockSpec((tn, tka), xa_map),
                pl.BlockSpec((tkv, fv_pad), wv_map),
                pl.BlockSpec((tka, f_pad - fv_pad), wa_map),
                pl.BlockSpec((1, f_pad), lambda i, k: (0, 0)),
            ],
            out_specs=pl.BlockSpec((tn, f_pad), lambda i, k: (i, 0)),
            scratch_shapes=[pltpu.VMEM((tn, f_pad), jnp.float32)],
        ),
        compiler_params=pltpu.CompilerParams(
            dimension_semantics=("parallel", "arbitrary"),
            vmem_limit_bytes=vmem_limit,
        ),
    )(xv, xa, wv, wa, bias)


# ----------------------------------------------------------------------------
# Kernel 2: heads, one grid step over the whole batch (no per-b grid overhead)
#   feat laid out as (dev, B*seg, F_pad) bf16 so every matmul is 2D (no
#   in-kernel reshapes):
#     - x_max = max over dev                              (B*seg, F_pad)
#     - frames = x_max @ Wf + bf  (Conv1d k=1 == linear)  (B*seg, C_pad)
#     - fused  = pool @ x_max     ('max')  or pool @ mean_dev(feat) ('mean')
#     - masked LayerNorm over the F_real real columns, then @ Wc + bc.
# ----------------------------------------------------------------------------
def _head_kernel(fusion_type, f_real,
                 feat_ref, wf_ref, wc_ref, pool_ref, vecf_ref, vecc_ref,
                 cls_ref, frames_ref):
    feat = feat_ref[...]                       # (dev, M, F_pad) bf16
    gamma = vecf_ref[0:1, :]                   # (1, F_pad) f32
    beta = vecf_ref[1:2, :]
    mask = vecf_ref[2:3, :]
    bf = vecc_ref[0:1, :]                      # (1, C_pad) f32
    bc = vecc_ref[1:2, :]

    # torch.max(x, dim=1)[0]  (devices axis)
    x_max = jnp.max(feat, axis=0)              # (M, F_pad) bf16

    # mlp_head_frames: Conv1d(F -> C, k=1) over segments == per-row linear
    frames_ref[...] = jnp.dot(
        x_max, wf_ref[...], preferred_element_type=jnp.float32) + bf

    if fusion_type == "max":
        fused = jnp.dot(pool_ref[...], x_max.astype(jnp.float32),
                        preferred_element_type=jnp.float32)       # (B, F_pad)
    else:  # "mean": mean over segments then mean over devices (means commute)
        x_mean_dev = jnp.mean(feat.astype(jnp.float32), axis=0)   # (M, F_pad)
        fused = jnp.dot(pool_ref[...], x_mean_dev,
                        preferred_element_type=jnp.float32)

    # LayerNorm over the f_real real feature columns, eps = 1e-5
    inv_f = 1.0 / f_real
    mu = jnp.sum(fused * mask, axis=-1, keepdims=True) * inv_f
    centered = (fused - mu) * mask
    var = jnp.sum(centered * centered, axis=-1, keepdims=True) * inv_f
    normed = centered * jax.lax.rsqrt(var + 1e-5) * gamma + beta

    cls_ref[...] = jnp.dot(
        normed.astype(jnp.bfloat16), wc_ref[...],
        preferred_element_type=jnp.float32) + bc


def pallas_heads(feat3, wf, wc, pool, vecf, vecc, *, fusion_type, f_real,
                 c_pad):
    dev, M, f_pad = feat3.shape
    B = pool.shape[0]
    kern = functools.partial(_head_kernel, fusion_type, float(f_real))
    return pl.pallas_call(
        kern,
        out_shape=(
            jax.ShapeDtypeStruct((B, c_pad), jnp.float32),   # x_cls (padded)
            jax.ShapeDtypeStruct((M, c_pad), jnp.float32),   # frame logits
        ),
        grid_spec=pltpu.PrefetchScalarGridSpec(
            num_scalar_prefetch=0,
            grid=(1,),
            in_specs=[
                pl.BlockSpec((dev, M, f_pad), lambda i: (0, 0, 0)),
                pl.BlockSpec((f_pad, c_pad), lambda i: (0, 0)),
                pl.BlockSpec((f_pad, c_pad), lambda i: (0, 0)),
                pl.BlockSpec((B, M), lambda i: (0, 0)),
                pl.BlockSpec((3, f_pad), lambda i: (0, 0)),
                pl.BlockSpec((2, c_pad), lambda i: (0, 0)),
            ],
            out_specs=(
                pl.BlockSpec((B, c_pad), lambda i: (0, 0)),
                pl.BlockSpec((M, c_pad), lambda i: (0, 0)),
            ),
        ),
        compiler_params=pltpu.CompilerParams(
            dimension_semantics=("arbitrary",),
            vmem_limit_bytes=HEAD_VMEM_LIMIT,
        ),
    )(feat3, wf, wc, pool, vecf, vecc)


# ----------------------------------------------------------------------------
# Builder: one-time parameter packing + jitted forward
# ----------------------------------------------------------------------------
def make_cnn2d_forward(params, x_shape, audio_shape, fusion_type="max"):
    B, dev, seg, D, H, W = x_shape
    _, _, _, T, Fa = audio_shape
    N = B * dev * seg
    M = B * seg
    Kv, Ka = D * H * W, T * Fa
    len_feature = params["wv"].shape[1]
    num_classes = params["w_cls"].shape[1]
    f_real = len_feature + 384

    # padded geometry (lane-dense slabs)
    fv_pad = _round_up(len_feature, 128)
    f_pad = fv_pad + 384                     # 384 is already 3*128
    c_pad = _round_up(num_classes, 128)
    tn, (kv_pad, tkv, kv_tiles), (ka_pad, tka, ka_tiles), enc_vmem = \
        _choose_tiles(N, Kv, Ka, fv_pad, f_pad)
    n_pad = _round_up(max(N, tn), tn)

    # ---- one-time weight packing (hoisted out of the per-call forward) ----
    wv = jnp.zeros((kv_pad, fv_pad), jnp.bfloat16).at[:Kv, :len_feature].set(
        params["wv"].astype(jnp.bfloat16))
    wa = jnp.zeros((ka_pad, 384), jnp.bfloat16).at[:Ka, :].set(
        params["wa"].astype(jnp.bfloat16))
    bias = jnp.zeros((1, f_pad), jnp.float32)
    bias = bias.at[0, :len_feature].set(params["bv"])
    bias = bias.at[0, fv_pad:].set(params["ba"])

    # logical feature j -> slab col j (video) / j - len_feature + fv_pad (audio)
    def scatter_feature_rows(w):
        out = jnp.zeros((f_pad,) + w.shape[1:], jnp.float32)
        out = out.at[:len_feature].set(w[:len_feature])
        out = out.at[fv_pad:].set(w[len_feature:])
        return out

    wf = jnp.zeros((f_pad, c_pad), jnp.float32).at[:, :num_classes].set(
        scatter_feature_rows(params["w_frames"])).astype(jnp.bfloat16)
    wc = jnp.zeros((f_pad, c_pad), jnp.float32).at[:, :num_classes].set(
        scatter_feature_rows(params["w_cls"])).astype(jnp.bfloat16)
    vecf = jnp.stack([scatter_feature_rows(params["ln_gamma"]),
                      scatter_feature_rows(params["ln_beta"]),
                      scatter_feature_rows(jnp.ones((f_real,), jnp.float32))],
                     axis=0)                                   # (3, f_pad)
    vecc = jnp.zeros((2, c_pad), jnp.float32)
    vecc = vecc.at[0, :num_classes].set(params["b_frames"])
    vecc = vecc.at[1, :num_classes].set(params["b_cls"])
    # per-batch segment-mean pooling matrix (B, B*seg)
    pool = (jnp.kron(jnp.eye(B, dtype=jnp.float32),
                     jnp.ones((1, seg), jnp.float32)) / float(seg))

    @jax.jit
    def forward(x, audio_data):
        # bf16 activations, zero-padded (zeros are inert in the matmul)
        xv = jnp.pad(x.reshape(N, Kv).astype(jnp.bfloat16),
                     ((0, n_pad - N), (0, kv_pad - Kv)))
        xa = jnp.pad(audio_data.reshape(N, Ka).astype(jnp.bfloat16),
                     ((0, n_pad - N), (0, ka_pad - Ka)))

        feat_pad = pallas_fused_encoder(
            xv, xa, wv, wa, bias, tn=tn, tkv=tkv, tka=tka,
            kv_tiles=kv_tiles, ka_tiles=ka_tiles,
            fv_pad=fv_pad, f_pad=f_pad, vmem_limit=enc_vmem)

        # (dev, B*seg, F_pad) layout so every head matmul is 2D
        feat3 = (feat_pad[:N].reshape(B, dev, seg, f_pad)
                 .transpose(1, 0, 2, 3).reshape(dev, M, f_pad))

        cls_pad, frames_pad = pallas_heads(
            feat3, wf, wc, pool, vecf, vecc,
            fusion_type=fusion_type, f_real=f_real, c_pad=c_pad)

        x_cls = cls_pad[:, :num_classes]
        x_frames = frames_pad.reshape(B, seg, c_pad)[:, :, :num_classes]
        return x_cls, x_frames

    return forward


def init_params(key, d_video_in, d_audio_in, len_feature, num_classes):
    F_total = len_feature + 384
    ks = jax.random.split(key, 6)
    s = 0.02
    return {
        # stand-in encoders (flatten -> linear)
        "wv": s * jax.random.normal(ks[0], (d_video_in, len_feature), jnp.float32),
        "bv": jnp.zeros((len_feature,), jnp.float32),
        "wa": s * jax.random.normal(ks[1], (d_audio_in, 384), jnp.float32),
        "ba": jnp.zeros((384,), jnp.float32),
        # mlp_head_frames: Conv1d(F_total -> num_classes, k=1)
        "w_frames": s * jax.random.normal(ks[2], (F_total, num_classes), jnp.float32),
        "b_frames": s * jax.random.normal(ks[3], (num_classes,), jnp.float32),
        # mlp_head: LayerNorm(F_total) + Linear(F_total -> num_classes)
        "ln_gamma": jnp.ones((F_total,), jnp.float32),
        "ln_beta": jnp.zeros((F_total,), jnp.float32),
        "w_cls": s * jax.random.normal(ks[4], (F_total, num_classes), jnp.float32),
        "b_cls": s * jax.random.normal(ks[5], (num_classes,), jnp.float32),
    }


if __name__ == "__main__":
    key = jax.random.PRNGKey(0)
    k_x, k_a, k_p = jax.random.split(key, 3)

    # small shapes: batch=2, devices=2, segments=4, video D=3,H=16,W=16,
    # audio T=8, freq=16, len_feature=32, num_classes=8
    B, dev, seg = 2, 2, 4
    D, H, W = 3, 16, 16
    T, Fa = 8, 16
    len_feature, num_classes = 32, 8

    x = jax.random.normal(k_x, (B, dev, seg, D, H, W), jnp.float32)
    audio = jax.random.normal(k_a, (B, dev, seg, T, Fa), jnp.float32)
    params = init_params(k_p, D * H * W, T * Fa, len_feature, num_classes)

    fwd = make_cnn2d_forward(params, x.shape, audio.shape, fusion_type="max")
    x_cls, x_frames = fwd(x, audio)
    jax.block_until_ready((x_cls, x_frames))

    assert x_cls.shape == (B, num_classes), x_cls.shape
    assert x_frames.shape == (B, seg, num_classes), x_frames.shape
    assert bool(jnp.isfinite(x_cls).all()) and bool(jnp.isfinite(x_frames).all())
    print("KERNEL_OK")
</pallas_src>

<mosaic_0001>
module attributes {stable_mosaic.version = 11 : i64} {
  func.func @_encoder_kernel(%arg0: i32, %arg1: i32, %arg2: memref<16x768xbf16, #tpu.memory_space<vmem>>, %arg3: memref<16x128xbf16, #tpu.memory_space<vmem>>, %arg4: memref<768x128xbf16, #tpu.memory_space<vmem>>, %arg5: memref<128x384xbf16, #tpu.memory_space<vmem>>, %arg6: memref<1x512xf32, #tpu.memory_space<vmem>>, %arg7: memref<16x512xbf16, #tpu.memory_space<vmem>>, %arg8: memref<16x512xf32, #tpu.memory_space<vmem>>) attributes {dimension_semantics = [#tpu.dimension_semantics<parallel>, #tpu.dimension_semantics<arbitrary>], iteration_bounds = array<i64: 1, 2>, scalar_prefetch = 0 : i64, scratch_operands = 1 : i64, tpu.core_type = #tpu.core_type<tc>, window_params = [{transform_indices = @transform_0, window_bounds = array<i64: 16, 768>}, {transform_indices = @transform_1, window_bounds = array<i64: 16, 128>}, {transform_indices = @transform_2, window_bounds = array<i64: 768, 128>}, {transform_indices = @transform_3, window_bounds = array<i64: 128, 384>}, {pipeline_mode = #tpu.pipeline_mode<synchronous>, transform_indices = @transform_4, window_bounds = array<i64: 1, 512>}, {transform_indices = @transform_5, window_bounds = array<i64: 16, 512>}]} {
    %c0_i32 = arith.constant 0 : i32
    %0 = arith.cmpi eq, %arg1, %c0_i32 : i32
    %1 = arith.extui %0 : i1 to i32
    %c0_i32_0 = arith.constant 0 : i32
    %2 = arith.cmpi ne, %1, %c0_i32_0 : i32
    scf.if %2 {
      %c0 = arith.constant 0 : index
      %c0_6 = arith.constant 0 : index
      %12 = vector.load %arg6[%c0, %c0_6] : memref<1x512xf32, #tpu.memory_space<vmem>>, vector<1x512xf32>
      %13 = vector.shape_cast %12 : vector<1x512xf32> to vector<1x512xf32>
      %14 = vector.broadcast %13 : vector<1x512xf32> to vector<16x512xf32>
      %c0_7 = arith.constant 0 : index
      %c0_8 = arith.constant 0 : index
      %15 = vector.load %arg8[%c0_7, %c0_8] : memref<16x512xf32, #tpu.memory_space<vmem>>, vector<16x512xf32>
      tpu.vector_store %arg8[%c0_7, %c0_8], %14 {strides = array<i32>} : memref<16x512xf32, #tpu.memory_space<vmem>>, vector<16x512xf32>,
    } else {
    }
    %c1_i32 = arith.constant 1 : i32
    %3 = arith.cmpi slt, %arg1, %c1_i32 : i32
    %4 = arith.extui %3 : i1 to i32
    %c0_i32_1 = arith.constant 0 : i32
    %5 = arith.cmpi ne, %4, %c0_i32_1 : i32
    scf.if %5 {
      %c0 = arith.constant 0 : index
      %c0_6 = arith.constant 0 : index
      %12 = vector.load %arg8[%c0, %c0_6] : memref<16x512xf32, #tpu.memory_space<vmem>>, vector<16x128xf32>
      %c0_7 = arith.constant 0 : index
      %c0_8 = arith.constant 0 : index
      %13 = vector.load %arg2[%c0_7, %c0_8] : memref<16x768xbf16, #tpu.memory_space<vmem>>, vector<16x768xbf16>
      %c0_9 = arith.constant 0 : index
      %c0_10 = arith.constant 0 : index
      %14 = vector.load %arg4[%c0_9, %c0_10] : memref<768x128xbf16, #tpu.memory_space<vmem>>, vector<768x128xbf16>
      %cst = arith.constant dense<0.000000e+00> : vector<16x128xf32>
      %15 = tpu.matmul %13, %14, %cst {dimension_numbers = #tpu.dot_dimension_numbers<[1], [0], [0], [1], [0, 0, 1, 1], [], []>} : vector<16x768xbf16>, vector<768x128xbf16>, vector<16x128xf32> -> vector<16x128xf32>
      %16 = arith.addf %12, %15 : vector<16x128xf32>
      %c0_11 = arith.constant 0 : index
      %c0_12 = arith.constant 0 : index
      %17 = vector.load %arg8[%c0_11, %c0_12] : memref<16x512xf32, #tpu.memory_space<vmem>>, vector<16x128xf32>
      tpu.vector_store %arg8[%c0_11, %c0_12], %16 {strides = array<i32>} : memref<16x512xf32, #tpu.memory_space<vmem>>, vector<16x128xf32>,
    } else {
    }
    %c1_i32_2 = arith.constant 1 : i32
    %6 = arith.cmpi sge, %arg1, %c1_i32_2 : i32
    %7 = arith.extui %6 : i1 to i32
    %c0_i32_3 = arith.constant 0 : i32
    %8 = arith.cmpi ne, %7, %c0_i32_3 : i32
    scf.if %8 {
      %c0 = arith.constant 0 : index
      %c128 = arith.constant 128 : index
      %12 = vector.load %arg8[%c0, %c128] : memref<16x512xf32, #tpu.memory_space<vmem>>, vector<16x384xf32>
      %c0_6 = arith.constant 0 : index
      %c0_7 = arith.constant 0 : index
      %13 = vector.load %arg3[%c0_6, %c0_7] : memref<16x128xbf16, #tpu.memory_space<vmem>>, vector<16x128xbf16>
      %c0_8 = arith.constant 0 : index
      %c0_9 = arith.constant 0 : index
      %14 = vector.load %arg5[%c0_8, %c0_9] : memref<128x384xbf16, #tpu.memory_space<vmem>>, vector<128x384xbf16>
      %cst = arith.constant dense<0.000000e+00> : vector<16x384xf32>
      %15 = tpu.matmul %13, %14, %cst {dimension_numbers = #tpu.dot_dimension_numbers<[1], [0], [0], [1], [0, 0, 1, 1], [], []>} : vector<16x128xbf16>, vector<128x384xbf16>, vector<16x384xf32> -> vector<16x384xf32>
      %16 = arith.addf %12, %15 : vector<16x384xf32>
      %c0_10 = arith.constant 0 : index
      %c128_11 = arith.constant 128 : index
      %17 = vector.load %arg8[%c0_10, %c128_11] : memref<16x512xf32, #tpu.memory_space<vmem>>, vector<16x384xf32>
      tpu.vector_store %arg8[%c0_10, %c128_11], %16 {strides = array<i32>} : memref<16x512xf32, #tpu.memory_space<vmem>>, vector<16x384xf32>,
    } else {
    }
    %c1_i32_4 = arith.constant 1 : i32
    %9 = arith.cmpi eq, %arg1, %c1_i32_4 : i32
    %10 = arith.extui %9 : i1 to i32
    %c0_i32_5 = arith.constant 0 : i32
    %11 = arith.cmpi ne, %10, %c0_i32_5 : i32
    scf.if %11 {
      %c0 = arith.constant 0 : index
      %c0_6 = arith.constant 0 : index
      %12 = vector.load %arg8[%c0, %c0_6] : memref<16x512xf32, #tpu.memory_space<vmem>>, vector<16x512xf32>
      %13 = arith.truncf %12 : vector<16x512xf32> to vector<16x512xbf16>
      %c0_7 = arith.constant 0 : index
      %c0_8 = arith.constant 0 : index
      %14 = vector.load %arg7[%c0_7, %c0_8] : memref<16x512xbf16, #tpu.memory_space<vmem>>, vector<16x512xbf16>
      tpu.vector_store %arg7[%c0_7, %c0_8], %13 {strides = array<i32>} : memref<16x512xbf16, #tpu.memory_space<vmem>>, vector<16x512xbf16>,
    } else {
    }
    return
  }
  func.func @transform_0(%arg0: i32, %arg1: i32) -> (i32, i32) {
    %c0_i32 = arith.constant 0 : i32
    %0 = arith.minsi %arg1, %c0_i32 : i32
    %c0_i32_0 = arith.constant 0 : i32
    return %arg0, %0 : i32, i32
  }
  func.func @transform_1(%arg0: i32, %arg1: i32) -> (i32, i32) {
    %c1_i32 = arith.constant 1 : i32
    %0 = arith.subi %arg1, %c1_i32 : i32
    %c0_i32 = arith.constant 0 : i32
    %1 = arith.maxsi %0, %c0_i32 : i32
    %c0_i32_0 = arith.constant 0 : i32
    return %arg0, %1 : i32, i32
  }
  func.func @transform_2(%arg0: i32, %arg1: i32) -> (i32, i32) {
    %c0_i32 = arith.constant 0 : i32
    %0 = arith.minsi %arg1, %c0_i32 : i32
    %c0_i32_0 = arith.constant 0 : i32
    %c0_i32_1 = arith.constant 0 : i32
    return %0, %c0_i32_0 : i32, i32
  }
  func.func @transform_3(%arg0: i32, %arg1: i32) -> (i32, i32) {
    %c1_i32 = arith.constant 1 : i32
    %0 = arith.subi %arg1, %c1_i32 : i32
    %c0_i32 = arith.constant 0 : i32
    %1 = arith.maxsi %0, %c0_i32 : i32
    %c0_i32_0 = arith.constant 0 : i32
    %c0_i32_1 = arith.constant 0 : i32
    return %1, %c0_i32_0 : i32, i32
  }
  func.func @transform_4(%arg0: i32, %arg1: i32) -> (i32, i32) {
    %c0_i32 = arith.constant 0 : i32
    %c0_i32_0 = arith.constant 0 : i32
    %c0_i32_1 = arith.constant 0 : i32
    return %c0_i32, %c0_i32_0 : i32, i32
  }
  func.func @transform_5(%arg0: i32, %arg1: i32) -> (i32, i32) {
    %c0_i32 = arith.constant 0 : i32
    %c0_i32_0 = arith.constant 0 : i32
    return %arg0, %c0_i32 : i32, i32
  }
}

module attributes {stable_mosaic.version = 11 : i64} {
  func.func @_head_kernel(%arg0: i32, %arg1: memref<2x8x512xbf16, #tpu.memory_space<vmem>>, %arg2: memref<512x128xbf16, #tpu.memory_space<vmem>>, %arg3: memref<512x128xbf16, #tpu.memory_space<vmem>>, %arg4: memref<2x8xf32, #tpu.memory_space<vmem>>, %arg5: memref<3x512xf32, #tpu.memory_space<vmem>>, %arg6: memref<2x128xf32, #tpu.memory_space<vmem>>, %arg7: memref<2x128xf32, #tpu.memory_space<vmem>>, %arg8: memref<8x128xf32, #tpu.memory_space<vmem>>) attributes {dimension_semantics = [#tpu.dimension_semantics<arbitrary>], iteration_bounds = array<i64: 1>, scalar_prefetch = 0 : i64, scratch_operands = 0 : i64, tpu.core_type = #tpu.core_type<tc>, window_params = [{pipeline_mode = #tpu.pipeline_mode<synchronous>, transform_indices = @transform_0, window_bounds = array<i64: 2, 8, 512>}, {pipeline_mode = #tpu.pipeline_mode<synchronous>, transform_indices = @transform_1, window_bounds = array<i64: 512, 128>}, {pipeline_mode = #tpu.pipeline_mode<synchronous>, transform_indices = @transform_2, window_bounds = array<i64: 512, 128>}, {pipeline_mode = #tpu.pipeline_mode<synchronous>, transform_indices = @transform_3, window_bounds = array<i64: 2, 8>}, {pipeline_mode = #tpu.pipeline_mode<synchronous>, transform_indices = @transform_4, window_bounds = array<i64: 3, 512>}, {pipeline_mode = #tpu.pipeline_mode<synchronous>, transform_indices = @transform_5, window_bounds = array<i64: 2, 128>}, {pipeline_mode = #tpu.pipeline_mode<synchronous>, transform_indices = @transform_6, window_bounds = array<i64: 2, 128>}, {pipeline_mode = #tpu.pipeline_mode<synchronous>, transform_indices = @transform_7, window_bounds = array<i64: 8, 128>}]} {
    %c0 = arith.constant 0 : index
    %c0_0 = arith.constant 0 : index
    %c0_1 = arith.constant 0 : index
    %0 = vector.load %arg1[%c0, %c0_0, %c0_1] : memref<2x8x512xbf16, #tpu.memory_space<vmem>>, vector<2x8x512xbf16>
    %c0_2 = arith.constant 0 : index
    %c0_3 = arith.constant 0 : index
    %1 = vector.load %arg5[%c0_2, %c0_3] : memref<3x512xf32, #tpu.memory_space<vmem>>, vector<1x512xf32>
    %c1 = arith.constant 1 : index
    %c0_4 = arith.constant 0 : index
    %2 = vector.load %arg5[%c1, %c0_4] : memref<3x512xf32, #tpu.memory_space<vmem>>, vector<1x512xf32>
    %c2 = arith.constant 2 : index
    %c0_5 = arith.constant 0 : index
    %3 = vector.load %arg5[%c2, %c0_5] : memref<3x512xf32, #tpu.memory_space<vmem>>, vector<1x512xf32>
    %c0_6 = arith.constant 0 : index
    %c0_7 = arith.constant 0 : index
    %4 = vector.load %arg6[%c0_6, %c0_7] : memref<2x128xf32, #tpu.memory_space<vmem>>, vector<1x128xf32>
    %c1_8 = arith.constant 1 : index
    %c0_9 = arith.constant 0 : index
    %5 = vector.load %arg6[%c1_8, %c0_9] : memref<2x128xf32, #tpu.memory_space<vmem>>, vector<1x128xf32>
    %cst = arith.constant dense<0xFF80> : vector<8x512xbf16>
    %6 = vector.multi_reduction <maximumf>, %0, %cst [0] : vector<2x8x512xbf16> to vector<8x512xbf16>
    %c0_10 = arith.constant 0 : index
    %c0_11 = arith.constant 0 : index
    %7 = vector.load %arg2[%c0_10, %c0_11] : memref<512x128xbf16, #tpu.memory_space<vmem>>, vector<512x128xbf16>
    %cst_12 = arith.constant dense<0.000000e+00> : vector<8x128xf32>
    %8 = tpu.matmul %6, %7, %cst_12 {dimension_numbers = #tpu.dot_dimension_numbers<[1], [0], [0], [1], [0, 0, 1, 1], [], []>} : vector<8x512xbf16>, vector<512x128xbf16>, vector<8x128xf32> -> vector<8x128xf32>
    %9 = vector.broadcast %4 : vector<1x128xf32> to vector<8x128xf32>
    %10 = arith.addf %8, %9 : vector<8x128xf32>
    %c0_13 = arith.constant 0 : index
    %c0_14 = arith.constant 0 : index
    %11 = vector.load %arg8[%c0_13, %c0_14] : memref<8x128xf32, #tpu.memory_space<vmem>>, vector<8x128xf32>
    tpu.vector_store %arg8[%c0_13, %c0_14], %10 {strides = array<i32>} : memref<8x128xf32, #tpu.memory_space<vmem>>, vector<8x128xf32>,
    %c0_15 = arith.constant 0 : index
    %c0_16 = arith.constant 0 : index
    %12 = vector.load %arg4[%c0_15, %c0_16] : memref<2x8xf32, #tpu.memory_space<vmem>>, vector<2x8xf32>
    %13 = arith.extf %6 : vector<8x512xbf16> to vector<8x512xf32>
    %cst_17 = arith.constant dense<0.000000e+00> : vector<2x512xf32>
    %14 = tpu.matmul %12, %13, %cst_17 {dimension_numbers = #tpu.dot_dimension_numbers<[1], [0], [0], [1], [0, 0, 1, 1], [], []>} : vector<2x8xf32>, vector<8x512xf32>, vector<2x512xf32> -> vector<2x512xf32>
    %15 = vector.broadcast %3 : vector<1x512xf32> to vector<2x512xf32>
    %16 = arith.mulf %14, %15 : vector<2x512xf32>
    %cst_18 = arith.constant dense<0.000000e+00> : vector<2xf32>
    %17 = vector.multi_reduction <add>, %16, %cst_18 [1] : vector<2x512xf32> to vector<2xf32>
    %18 = vector.shape_cast %17 : vector<2xf32> to vector<2x1xf32>
    %cst_19 = arith.constant 0.00240384624 : f32
    %19 = vector.broadcast %cst_19 : f32 to vector<2x1xf32>
    %20 = arith.mulf %18, %19 : vector<2x1xf32>
    %21 = vector.broadcast %20 : vector<2x1xf32> to vector<2x512xf32>
    %22 = arith.subf %14, %21 : vector<2x512xf32>
    %23 = vector.broadcast %3 : vector<1x512xf32> to vector<2x512xf32>
    %24 = arith.mulf %22, %23 : vector<2x512xf32>
    %25 = arith.mulf %24, %24 : vector<2x512xf32>
    %cst_20 = arith.constant dense<0.000000e+00> : vector<2xf32>
    %26 = vector.multi_reduction <add>, %25, %cst_20 [1] : vector<2x512xf32> to vector<2xf32>
    %27 = vector.shape_cast %26 : vector<2xf32> to vector<2x1xf32>
    %cst_21 = arith.constant 0.00240384624 : f32
    %28 = vector.broadcast %cst_21 : f32 to vector<2x1xf32>
    %29 = arith.mulf %27, %28 : vector<2x1xf32>
    %cst_22 = arith.constant 9.99999974E-6 : f32
    %30 = vector.broadcast %cst_22 : f32 to vector<2x1xf32>
    %31 = arith.addf %29, %30 : vector<2x1xf32>
    %32 = math.rsqrt %31 : vector<2x1xf32>
    %33 = vector.broadcast %32 : vector<2x1xf32> to vector<2x512xf32>
    %34 = arith.mulf %24, %33 : vector<2x512xf32>
    %35 = vector.broadcast %1 : vector<1x512xf32> to vector<2x512xf32>
    %36 = arith.mulf %34, %35 : vector<2x512xf32>
    %37 = vector.broadcast %2 : vector<1x512xf32> to vector<2x512xf32>
    %38 = arith.addf %36, %37 : vector<2x512xf32>
    %39 = arith.truncf %38 : vector<2x512xf32> to vector<2x512xbf16>
    %c0_23 = arith.constant 0 : index
    %c0_24 = arith.constant 0 : index
    %40 = vector.load %arg3[%c0_23, %c0_24] : memref<512x128xbf16, #tpu.memory_space<vmem>>, vector<512x128xbf16>
    %cst_25 = arith.constant dense<0.000000e+00> : vector<2x128xf32>
    %41 = tpu.matmul %39, %40, %cst_25 {dimension_numbers = #tpu.dot_dimension_numbers<[1], [0], [0], [1], [0, 0, 1, 1], [], []>} : vector<2x512xbf16>, vector<512x128xbf16>, vector<2x128xf32> -> vector<2x128xf32>
    %42 = vector.broadcast %5 : vector<1x128xf32> to vector<2x128xf32>
    %43 = arith.addf %41, %42 : vector<2x128xf32>
    %c0_26 = arith.constant 0 : index
    %c0_27 = arith.constant 0 : index
    %44 = vector.load %arg7[%c0_26, %c0_27] : memref<2x128xf32, #tpu.memory_space<vmem>>, vector<2x128xf32>
    tpu.vector_store %arg7[%c0_26, %c0_27], %43 {strides = array<i32>} : memref<2x128xf32, #tpu.memory_space<vmem>>, vector<2x128xf32>,
    return
  }
  func.func @transform_0(%arg0: i32) -> (i32, i32, i32) {
    %c0_i32 = arith.constant 0 : i32
    %c0_i32_0 = arith.constant 0 : i32
    %c0_i32_1 = arith.constant 0 : i32
    %c0_i32_2 = arith.constant 0 : i32
    return %c0_i32, %c0_i32_0, %c0_i32_1 : i32, i32, i32
  }
  func.func @transform_1(%arg0: i32) -> (i32, i32) {
    %c0_i32 = arith.constant 0 : i32
    %c0_i32_0 = arith.constant 0 : i32
    %c0_i32_1 = arith.constant 0 : i32
    return %c0_i32, %c0_i32_0 : i32, i32
  }
  func.func @transform_2(%arg0: i32) -> (i32, i32) {
    %c0_i32 = arith.constant 0 : i32
    %c0_i32_0 = arith.constant 0 : i32
    %c0_i32_1 = arith.constant 0 : i32
    return %c0_i32, %c0_i32_0 : i32, i32
  }
  func.func @transform_3(%arg0: i32) -> (i32, i32) {
    %c0_i32 = arith.constant 0 : i32
    %c0_i32_0 = arith.constant 0 : i32
    %c0_i32_1 = arith.constant 0 : i32
    return %c0_i32, %c0_i32_0 : i32, i32
  }
  func.func @transform_4(%arg0: i32) -> (i32, i32) {
    %c0_i32 = arith.constant 0 : i32
    %c0_i32_0 = arith.constant 0 : i32
    %c0_i32_1 = arith.constant 0 : i32
    return %c0_i32, %c0_i32_0 : i32, i32
  }
  func.func @transform_5(%arg0: i32) -> (i32, i32) {
    %c0_i32 = arith.constant 0 : i32
    %c0_i32_0 = arith.constant 0 : i32
    %c0_i32_1 = arith.constant 0 : i32
    return %c0_i32, %c0_i32_0 : i32, i32
  }
  func.func @transform_6(%arg0: i32) -> (i32, i32) {
    %c0_i32 = arith.constant 0 : i32
    %c0_i32_0 = arith.constant 0 : i32
    %c0_i32_1 = arith.constant 0 : i32
    return %c0_i32, %c0_i32_0 : i32, i32
  }
  func.func @transform_7(%arg0: i32) -> (i32, i32) {
    %c0_i32 = arith.constant 0 : i32
    %c0_i32_0 = arith.constant 0 : i32
    %c0_i32_1 = arith.constant 0 : i32
    return %c0_i32, %c0_i32_0 : i32, i32
  }
}

</mosaic_0001>

<llo_original>
// kernel: forward.3
$region0: #{forward.3}
  #allocation0 [shape = 'u32[]', space=smem, size = 0x4, offset = 0x4, fixed_abs, tag = 'smem constant byte address 0x4 - core index']
  #allocation1 [shape = 'u32[72,128]{1,0:T(1,128)}', space=vmem, size = 0x9000, scoped, tag = 'internal scratch']
  %s0 = inlined_call_operand.vmem [shape: bf16[2,8,512], index: 0, kind: input, shape index: {}]
  %s1 = inlined_call_operand.vmem [shape: bf16[512,128], index: 1, kind: input, shape index: {}]
  %s2 = inlined_call_operand.vmem [shape: bf16[512,128], index: 2, kind: input, shape index: {}]
  %s3 = inlined_call_operand.vmem [shape: f32[2,8], index: 3, kind: input, shape index: {}]
  %s4 = inlined_call_operand.vmem [shape: f32[3,512], index: 4, kind: input, shape index: {}]
  %s5 = inlined_call_operand.vmem [shape: f32[2,128], index: 5, kind: input, shape index: {}]
  %s6 = inlined_call_operand.hbm [shape: f32[2,128], index: 6, kind: output, shape index: {0}]
  %s7 = inlined_call_operand.hbm [shape: f32[8,128], index: 7, kind: output, shape index: {1}]
  %8 = xla_tuple %s6, %s7
  %s9 = sld [smem:[#allocation0]]
  $region42: #{forward.3} parent=0
    _
  %s11 = ssub.s32 1, %s9
  %s12 = scalar_select 0, %s11, %s9
  $region1: #{forward.3} parent=0
    #allocation2 [shape = 'u8[1024]{0}', space=vmem, size = 0x400, scoped, tag = 'output window, operand 0, single buffered']
    #allocation3 [shape = 's32[1]{0}', space=sflag, size = 0x4, scoped, tag = 'scoped memory for forward.3']
    #allocation4 [shape = 'u8[4096]{0}', space=vmem, size = 0x1000, scoped, tag = 'output window, operand 1, single buffered']
    #allocation5 [shape = 's32[1]{0}', space=sflag, size = 0x4, scoped, tag = 'scoped memory for forward.3']
    %13 = vsyncpa [#allocation3], 0
    %14 = vsyncpa [#allocation5], 0
    // Predicated region
    $region2: #{forward.3} parent=1 // pred_check
      _
    $region3: #{forward.3} parent=1 // pred_check_branch
      %16 = sbr.rel (0) target = $region5
    $region4: #{forward.3} parent=1 // pred_region
      _
    $region5: #{forward.3} parent=1 // pred_fallthru
      _
    // Predicated region
    $region6: #{forward.3} parent=1 // pred_check
      _
    $region7: #{forward.3} parent=1 // pred_check_branch
      %18 = sbr.rel (0) target = $region9
    $region8: #{forward.3} parent=1 // pred_region
      _
    $region9: #{forward.3} parent=1 // pred_fallthru
      _
    // Predicated region
    $region10: #{forward.3} parent=1 // pred_check
      _
    $region11: #{forward.3} parent=1 // pred_check_branch
      %20 = sbr.rel (0) target = $region13
    $region12: #{forward.3} parent=1 // pred_region
      _
    $region13: #{forward.3} parent=1 // pred_fallthru
      _
    // Predicated region
    $region14: #{forward.3} parent=1 // pred_check
      _
    $region15: #{forward.3} parent=1 // pred_check_branch
      %22 = sbr.rel (0) target = $region17
    $region16: #{forward.3} parent=1 // pred_region
      _
    $region17: #{forward.3} parent=1 // pred_fallthru
      _
    // Predicated region
    $region18: #{forward.3} parent=1 // pred_check
      _
    $region19: #{forward.3} parent=1 // pred_check_branch
      %24 = sbr.rel (0) target = $region21
    $region20: #{forward.3} parent=1 // pred_region
      _
    $region21: #{forward.3} parent=1 // pred_fallthru
      _
    // Predicated region
    $region22: #{forward.3} parent=1 // pred_check
      _
    $region23: #{forward.3} parent=1 // pred_check_branch
      %26 = sbr.rel (0) target = $region25
    $region24: #{forward.3} parent=1 // pred_region
      _
    $region25: #{forward.3} parent=1 // pred_fallthru
      _
    %v27 = vld [vmem:[%s0] sm:$0xff]
    %v28 = vld [vmem:[%s0 + $0x8] sm:$0xff]
    %v29 = vld [vmem:[%s0 + $0x10] sm:$0xff]
    %v30 = vld [vmem:[%s0 + $0x18] sm:$0xff]
    %v31 = vld [vmem:[%s4] ss:$4 sm:$0xf]
    %s32 = scalar_lea.vmem %s4, 1
    %v33 = vld [vmem:[%s32] ss:$4 sm:$0xf]
    %s34 = scalar_lea.vmem %s4, 2
    %v35 = vld [vmem:[%s34] ss:$4 sm:$0xf]
    %v36 = vld [vmem:[%s5] sm:$0x1]
    %v37 = vld [vmem:[%s5 + $0x1] sm:$0x1]
    %v38 = vunpack.c.l.bf16 %v27
    %v39 = vunpack.c.h.bf16 %v27
    %v40 = vunpack.c.l.bf16 %v28
    %v41 = vunpack.c.h.bf16 %v28
    %v42 = vunpack.c.l.bf16 %v29
    %v43 = vunpack.c.h.bf16 %v29
    %v44 = vunpack.c.l.bf16 %v30
    %v45 = vunpack.c.h.bf16 %v30
    %v46 = vmax.f32 %v38, %v42
    %v47 = vmax.f32 %v39, %v43
    %v48 = vmax.f32 %v40, %v44
    %v49 = vmax.f32 %v41, %v45
    %v50 = vpack.c.bf16 %v46, %v46
    %v51 = vpack.c.bf16 %v47, %v47
    %v52 = vpack.c.bf16 %v48, %v48
    %v53 = vpack.c.bf16 %v49, %v49
    %v54 = vld [vmem:[%s1] sm:$0xf]
    %v55 = vld [vmem:[%s1 + $0x4] sm:$0xf]
    %v56 = vld [vmem:[%s1 + $0x8] sm:$0xf]
    %v57 = vld [vmem:[%s1 + $0xc] sm:$0xf]
    %v58 = vld [vmem:[%s1 + $0x10] sm:$0xf]
    %v59 = vld [vmem:[%s1 + $0x14] sm:$0xf]
    %v60 = vld [vmem:[%s1 + $0x18] sm:$0xf]
    %v61 = vld [vmem:[%s1 + $0x1c] sm:$0xf]
    %v62 = vld [vmem:[%s1 + $0x20] sm:$0xf]
    %v63 = vld [vmem:[%s1 + $0x24] sm:$0xf]
    %v64 = vld [vmem:[%s1 + $0x28] sm:$0xf]
    %v65 = vld [vmem:[%s1 + $0x2c] sm:$0xf]
    %v66 = vld [vmem:[%s1 + $0x30] sm:$0xf]
    %v67 = vld [vmem:[%s1 + $0x34] sm:$0xf]
    %v68 = vld [vmem:[%s1 + $0x38] sm:$0xf]
    %v69 = vld [vmem:[%s1 + $0x3c] sm:$0xf]
    %v70 = vld [vmem:[%s1 + $0x40] sm:$0xf]
    %v71 = vld [vmem:[%s1 + $0x44] sm:$0xf]
    %v72 = vld [vmem:[%s1 + $0x48] sm:$0xf]
    %v73 = vld [vmem:[%s1 + $0x4c] sm:$0xf]
    %v74 = vld [vmem:[%s1 + $0x50] sm:$0xf]
    %v75 = vld [vmem:[%s1 + $0x54] sm:$0xf]
    %v76 = vld [vmem:[%s1 + $0x58] sm:$0xf]
    %v77 = vld [vmem:[%s1 + $0x5c] sm:$0xf]
    %v78 = vld [vmem:[%s1 + $0x60] sm:$0xf]
    %v79 = vld [vmem:[%s1 + $0x64] sm:$0xf]
    %v80 = vld [vmem:[%s1 + $0x68] sm:$0xf]
    %v81 = vld [vmem:[%s1 + $0x6c] sm:$0xf]
    %v82 = vld [vmem:[%s1 + $0x70] sm:$0xf]
    %v83 = vld [vmem:[%s1 + $0x74] sm:$0xf]
    %v84 = vld [vmem:[%s1 + $0x78] sm:$0xf]
    %v85 = vld [vmem:[%s1 + $0x7c] sm:$0xf]
    %v86 = vld [vmem:[%s1 + $0x80] sm:$0xf]
    %v87 = vld [vmem:[%s1 + $0x84] sm:$0xf]
    %v88 = vld [vmem:[%s1 + $0x88] sm:$0xf]
    %v89 = vld [vmem:[%s1 + $0x8c] sm:$0xf]
    %v90 = vld [vmem:[%s1 + $0x90] sm:$0xf]
    %v91 = vld [vmem:[%s1 + $0x94] sm:$0xf]
    %v92 = vld [vmem:[%s1 + $0x98] sm:$0xf]
    %v93 = vld [vmem:[%s1 + $0x9c] sm:$0xf]
    %v94 = vld [vmem:[%s1 + $0xa0] sm:$0xf]
    %v95 = vld [vmem:[%s1 + $0xa4] sm:$0xf]
    %v96 = vld [vmem:[%s1 + $0xa8] sm:$0xf]
    %v97 = vld [vmem:[%s1 + $0xac] sm:$0xf]
    %v98 = vld [vmem:[%s1 + $0xb0] sm:$0xf]
    %v99 = vld [vmem:[%s1 + $0xb4] sm:$0xf]
    %v100 = vld [vmem:[%s1 + $0xb8] sm:$0xf]
    %v101 = vld [vmem:[%s1 + $0xbc] sm:$0xf]
    %v102 = vld [vmem:[%s1 + $0xc0] sm:$0xf]
    %v103 = vld [vmem:[%s1 + $0xc4] sm:$0xf]
    %v104 = vld [vmem:[%s1 + $0xc8] sm:$0xf]
    %v105 = vld [vmem:[%s1 + $0xcc] sm:$0xf]
    %v106 = vld [vmem:[%s1 + $0xd0] sm:$0xf]
    %v107 = vld [vmem:[%s1 + $0xd4] sm:$0xf]
    %v108 = vld [vmem:[%s1 + $0xd8] sm:$0xf]
    %v109 = vld [vmem:[%s1 + $0xdc] sm:$0xf]
    %v110 = vld [vmem:[%s1 + $0xe0] sm:$0xf]
    %v111 = vld [vmem:[%s1 + $0xe4] sm:$0xf]
    %v112 = vld [vmem:[%s1 + $0xe8] sm:$0xf]
    %v113 = vld [vmem:[%s1 + $0xec] sm:$0xf]
    %v114 = vld [vmem:[%s1 + $0xf0] sm:$0xf]
    %v115 = vld [vmem:[%s1 + $0xf4] sm:$0xf]
    %v116 = vld [vmem:[%s1 + $0xf8] sm:$0xf]
    %v117 = vld [vmem:[%s1 + $0xfc] sm:$0xf]
    %v118 = vperm.slane %v36, 0
    %v183 = vunpack.c.l.b16 %v54
    %v184 = vunpack.c.l.b16 %v55
    %v185 = vunpack.c.l.b16 %v56
    %v186 = vunpack.c.l.b16 %v57
    %v187 = vunpack.c.l.b16 %v58
    %v188 = vunpack.c.l.b16 %v59
    %v189 = vunpack.c.l.b16 %v60
    %v190 = vunpack.c.l.b16 %v61
    %v191 = vunpack.c.l.b16 %v62
    %v192 = vunpack.c.l.b16 %v63
    %v193 = vunpack.c.l.b16 %v64
    %v194 = vunpack.c.l.b16 %v65
    %v195 = vunpack.c.l.b16 %v66
    %v196 = vunpack.c.l.b16 %v67
    %v197 = vunpack.c.l.b16 %v68
    %v198 = vunpack.c.l.b16 %v69
    %v199 = vunpack.c.l.b16 %v70
    %v200 = vunpack.c.l.b16 %v71
    %v201 = vunpack.c.l.b16 %v72
    %v202 = vunpack.c.l.b16 %v73
    %v203 = vunpack.c.l.b16 %v74
    %v204 = vunpack.c.l.b16 %v75
    %v205 = vunpack.c.l.b16 %v76
    %v206 = vunpack.c.l.b16 %v77
    %v207 = vunpack.c.l.b16 %v78
    %v208 = vunpack.c.l.b16 %v79
    %v209 = vunpack.c.l.b16 %v80
    %v210 = vunpack.c.l.b16 %v81
    %v211 = vunpack.c.l.b16 %v82
    %v212 = vunpack.c.l.b16 %v83
    %v213 = vunpack.c.l.b16 %v84
    %v214 = vunpack.c.l.b16 %v85
    %v215 = vunpack.c.l.b16 %v86
    %v216 = vunpack.c.l.b16 %v87
    %v217 = vunpack.c.l.b16 %v88
    %v218 = vunpack.c.l.b16 %v89
    %v219 = vunpack.c.l.b16 %v90
    %v220 = vunpack.c.l.b16 %v91
    %v221 = vunpack.c.l.b16 %v92
    %v222 = vunpack.c.l.b16 %v93
    %v223 = vunpack.c.l.b16 %v94
    %v224 = vunpack.c.l.b16 %v95
    %v225 = vunpack.c.l.b16 %v96
    %v226 = vunpack.c.l.b16 %v97
    %v227 = vunpack.c.l.b16 %v98
    %v228 = vunpack.c.l.b16 %v99
    %v229 = vunpack.c.l.b16 %v100
    %v230 = vunpack.c.l.b16 %v101
    %v231 = vunpack.c.l.b16 %v102
    %v232 = vunpack.c.l.b16 %v103
    %v233 = vunpack.c.l.b16 %v104
    %v234 = vunpack.c.l.b16 %v105
    %v235 = vunpack.c.l.b16 %v106
    %v236 = vunpack.c.l.b16 %v107
    %v237 = vunpack.c.l.b16 %v108
    %v238 = vunpack.c.l.b16 %v109
    %v239 = vunpack.c.l.b16 %v110
    %v240 = vunpack.c.l.b16 %v111
    %v241 = vunpack.c.l.b16 %v112
    %v242 = vunpack.c.l.b16 %v113
    %v243 = vunpack.c.l.b16 %v114
    %v244 = vunpack.c.l.b16 %v115
    %v245 = vunpack.c.l.b16 %v116
    %v246 = vunpack.c.l.b16 %v117
    %v247 = vpack.c.b16 %v184, %v183
    %v248 = vpack.c.b16 %v186, %v185
    %v249 = vpack.c.b16 %v188, %v187
    %v250 = vpack.c.b16 %v190, %v189
    %v251 = vpack.c.b16 %v192, %v191
    %v252 = vpack.c.b16 %v194, %v193
    %v253 = vpack.c.b16 %v196, %v195
    %v254 = vpack.c.b16 %v198, %v197
    %v255 = vpack.c.b16 %v200, %v199
    %v256 = vpack.c.b16 %v202, %v201
    %v257 = vpack.c.b16 %v204, %v203
    %v258 = vpack.c.b16 %v206, %v205
    %v259 = vpack.c.b16 %v208, %v207
    %v260 = vpack.c.b16 %v210, %v209
    %v261 = vpack.c.b16 %v212, %v211
    %v262 = vpack.c.b16 %v214, %v213
    %v263 = vpack.c.b16 %v216, %v215
    %v264 = vpack.c.b16 %v218, %v217
    %v265 = vpack.c.b16 %v220, %v219
    %v266 = vpack.c.b16 %v222, %v221
    %v267 = vpack.c.b16 %v224, %v223
    %v268 = vpack.c.b16 %v226, %v225
    %v269 = vpack.c.b16 %v228, %v227
    %v270 = vpack.c.b16 %v230, %v229
    %v271 = vpack.c.b16 %v232, %v231
    %v272 = vpack.c.b16 %v234, %v233
    %v273 = vpack.c.b16 %v236, %v235
    %v274 = vpack.c.b16 %v238, %v237
    %v275 = vpack.c.b16 %v240, %v239
    %v276 = vpack.c.b16 %v242, %v241
    %v277 = vpack.c.b16 %v244, %v243
    %v278 = vpack.c.b16 %v246, %v245
    %311 = vmatpush.bf16.msra.mxu0 %v254
    %312 = vmatpush.bf16.msra.mxu0 %v253
    %313 = vmatpush.bf16.msra.mxu0 %v252
    %314 = vmatpush.bf16.msra.mxu0 %v251
    %315 = vmatpush.bf16.msra.mxu0 %v250
    %316 = vmatpush.bf16.msra.mxu0 %v249
    %317 = vmatpush.bf16.msra.mxu0 %v248
    %318 = vmatpush.bf16.msra.mxu0 %v247
    %319 = vmatmul.bf16.gmra.mxu0 %v50
    %v320 = vpop.f32.mrf.mxu0
    %v321 = vadd.f32 %v118, %v320
    %v322 = vpop.f32.mrf.mxu0
    %323 = vdwg.mxu0
    %324 = vmatpush.bf16.msra.mxu0 %v262
    %325 = vmatpush.bf16.msra.mxu0 %v261
    %326 = vmatpush.bf16.msra.mxu0 %v260
    %327 = vmatpush.bf16.msra.mxu0 %v259
    %328 = vmatpush.bf16.msra.mxu0 %v258
    %329 = vmatpush.bf16.msra.mxu0 %v257
    %330 = vmatpush.bf16.msra.mxu0 %v256
    %331 = vmatpush.bf16.msra.mxu0 %v255
    %332 = vmatmul.bf16.gmra.mxu0 %v51
    %v333 = vpop.f32.mrf.mxu0
    %v334 = vadd.f32 %v321, %v333
    %v335 = vpop.f32.mrf.mxu0
    %336 = vdwg.mxu0
    %337 = vmatpush.bf16.msra.mxu0 %v270
    %338 = vmatpush.bf16.msra.mxu0 %v269
    %339 = vmatpush.bf16.msra.mxu0 %v268
    %340 = vmatpush.bf16.msra.mxu0 %v267
    %341 = vmatpush.bf16.msra.mxu0 %v266
    %342 = vmatpush.bf16.msra.mxu0 %v265
    %343 = vmatpush.bf16.msra.mxu0 %v264
    %344 = vmatpush.bf16.msra.mxu0 %v263
    %345 = vmatmul.bf16.gmra.mxu0 %v52
    %v346 = vpop.f32.mrf.mxu0
    %v347 = vadd.f32 %v334, %v346
    %v348 = vpop.f32.mrf.mxu0
    %349 = vdwg.mxu0
    %350 = vmatpush.bf16.msra.mxu0 %v278
    %351 = vmatpush.bf16.msra.mxu0 %v277
    %352 = vmatpush.bf16.msra.mxu0 %v276
    %353 = vmatpush.bf16.msra.mxu0 %v275
    %354 = vmatpush.bf16.msra.mxu0 %v274
    %355 = vmatpush.bf16.msra.mxu0 %v273
    %356 = vmatpush.bf16.msra.mxu0 %v272
    %357 = vmatpush.bf16.msra.mxu0 %v271
    %358 = vmatmul.bf16.gmra.mxu0 %v53
    %v359 = vpop.f32.mrf.mxu0
    %v360 = vadd.f32 %v347, %v359
    %v361 = vpop.f32.mrf.mxu0
    %362 = vdwg.mxu0
    %363 = vst [vmem:[#allocation4] sm:$0xff] %v360
    %v364 = vld [vmem:[%s3] sm:$0x3]
    %v365 = vunpack.c.l.bf16 %v50
    %v366 = vunpack.c.l.bf16 %v51
    %v367 = vunpack.c.l.bf16 %v52
    %v368 = vunpack.c.l.bf16 %v53
    %vm369 = vcmask 64512
    %v371 = vsel %vm369, %v364, 0
    %373 = vmatpush.msra.mxu0 0.0
    %374 = vmatpush.msra.mxu0 0.0
    %375 = vmatpush.msra.mxu0 0.0
    %376 = vmatpush.msra.mxu0 0.0
    %377 = vmatpush.msra.mxu0 0.0
    %378 = vmatpush.msra.mxu0 0.0
    %379 = vmatpush.msra.mxu0 0.0
    %380 = vmatpush.msra.mxu0 0.0
    %381 = vmatpush.msra.mxu0 0.0
    %382 = vmatpush.msra.mxu0 0.0
    %383 = vmatpush.msra.mxu0 0.0
    %384 = vmatpush.msra.mxu0 0.0
    %385 = vmatpush.msra.mxu0 0.0
    %386 = vmatpush.msra.mxu0 0.0
    %387 = vmatpush.msra.mxu0 0.0
    %388 = vmatpush.msra.mxu0 %v365
    %389 = vmatmul.f32.gmra.mxu0 %v371
    %v390 = vpop.f32.mrf.mxu0
    %v391 = vadd.f32 0.0, %v390
    %392 = vdwg.mxu0
    %393 = vmatpush.msra.mxu0 0.0
    %394 = vmatpush.msra.mxu0 0.0
    %395 = vmatpush.msra.mxu0 0.0
    %396 = vmatpush.msra.mxu0 0.0
    %397 = vmatpush.msra.mxu0 0.0
    %398 = vmatpush.msra.mxu0 0.0
    %399 = vmatpush.msra.mxu0 0.0
    %400 = vmatpush.msra.mxu0 0.0
    %401 = vmatpush.msra.mxu0 0.0
    %402 = vmatpush.msra.mxu0 0.0
    %403 = vmatpush.msra.mxu0 0.0
    %404 = vmatpush.msra.mxu0 0.0
    %405 = vmatpush.msra.mxu0 0.0
    %406 = vmatpush.msra.mxu0 0.0
    %407 = vmatpush.msra.mxu0 0.0
    %408 = vmatpush.msra.mxu0 %v366
    %409 = vmatmul.f32.gmra.mxu0 %v371
    %v410 = vpop.f32.mrf.mxu0
    %v411 = vadd.f32 0.0, %v410
    %412 = vdwg.mxu0
    %413 = vmatpush.msra.mxu0 0.0
    %414 = vmatpush.msra.mxu0 0.0
    %415 = vmatpush.msra.mxu0 0.0
    %416 = vmatpush.msra.mxu0 0.0
    %417 = vmatpush.msra.mxu0 0.0
    %418 = vmatpush.msra.mxu0 0.0
    %419 = vmatpush.msra.mxu0 0.0
    %420 = vmatpush.msra.mxu0 0.0
    %421 = vmatpush.msra.mxu0 0.0
    %422 = vmatpush.msra.mxu0 0.0
    %423 = vmatpush.msra.mxu0 0.0
    %424 = vmatpush.msra.mxu0 0.0
    %425 = vmatpush.msra.mxu0 0.0
    %426 = vmatpush.msra.mxu0 0.0
    %427 = vmatpush.msra.mxu0 0.0
    %428 = vmatpush.msra.mxu0 %v367
    %429 = vmatmul.f32.gmra.mxu0 %v371
    %v430 = vpop.f32.mrf.mxu0
    %v431 = vadd.f32 0.0, %v430
    %432 = vdwg.mxu0
    %433 = vmatpush.msra.mxu0 0.0
    %434 = vmatpush.msra.mxu0 0.0
    %435 = vmatpush.msra.mxu0 0.0
    %436 = vmatpush.msra.mxu0 0.0
    %437 = vmatpush.msra.mxu0 0.0
    %438 = vmatpush.msra.mxu0 0.0
    %439 = vmatpush.msra.mxu0 0.0
    %440 = vmatpush.msra.mxu0 0.0
    %441 = vmatpush.msra.mxu0 0.0
    %442 = vmatpush.msra.mxu0 0.0
    %443 = vmatpush.msra.mxu0 0.0
    %444 = vmatpush.msra.mxu0 0.0
    %445 = vmatpush.msra.mxu0 0.0
    %446 = vmatpush.msra.mxu0 0.0
    %447 = vmatpush.msra.mxu0 0.0
    %448 = vmatpush.msra.mxu0 %v368
    %449 = vmatmul.f32.gmra.mxu0 %v371
    %v450 = vpop.f32.mrf.mxu0
    %v451 = vadd.f32 0.0, %v450
    %452 = vdwg.mxu0
    %v454 = vperm.slane %v35, 0
    %v455 = vperm.slane %v35, 1
    %v456 = vperm.slane %v35, 2
    %v457 = vperm.slane %v35, 3
    %v462 = vmul.f32 %v391, %v454
    %v463 = vmul.f32 %v411, %v455
    %v464 = vmul.f32 %v431, %v456
    %v465 = vmul.f32 %v451, %v457
    %vm466 = vcmask 1041408
    %v467 = vsel %vm466, %v462, 0.0
    %v468 = vsel %vm466, %v463, 0.0
    %v469 = vadd.f32 %v467, %v468
    %v470 = vsel %vm466, %v464, 0.0
    %v471 = vadd.f32 %v469, %v470
    %v472 = vsel %vm466, %v465, 0.0
    %v473 = vadd.f32 %v471, %v472
    %474 = vadd.xlane.f32.xlu0 %v473
    %v475 = vpop.xlane.xlu0 %474
    %v476 = vmul.f32 %v475, 0.0024038462
    %v477 = vsub.f32 %v391, %v476
    %v478 = vsub.f32 %v411, %v476
    %v479 = vsub.f32 %v431, %v476
    %v480 = vsub.f32 %v451, %v476
    %v481 = vmul.f32 %v477, %v454
    %v482 = vmul.f32 %v478, %v455
    %v483 = vmul.f32 %v479, %v456
    %v484 = vmul.f32 %v480, %v457
    %v485 = vmul.f32 %v481, %v481
    %v486 = vmul.f32 %v482, %v482
    %v487 = vmul.f32 %v483, %v483
    %v488 = vmul.f32 %v484, %v484
    %v489 = vsel %vm466, %v485, 0.0
    %v490 = vsel %vm466, %v486, 0.0
    %v491 = vadd.f32 %v489, %v490
    %v492 = vsel %vm466, %v487, 0.0
    %v493 = vadd.f32 %v491, %v492
    %v494 = vsel %vm466, %v488, 0.0
    %v495 = vadd.f32 %v493, %v494
    %496 = vadd.xlane.f32.xlu0 %v495
    %v497 = vpop.xlane.xlu0 %496
    %v498 = vmul.f32 %v497, 0.0024038462
    %v499 = vadd.f32 %v498, 1e-05
    %v500 = vrsqrt.pop %v499
    %v501 = vmul.f32 %v500, %v499
    %v502 = vmul.f32 %v501, %v500
    %v503 = vmul.f32 0.5, %v502
    %v504 = vsub.f32 1.5, %v503
    %v505 = vmul.f32 %v500, %v504
    %vm506 = vweird.f32 %v499
    %vm507 = vweird.f32 %v500
    %vm508 = vmor %vm506, %vm507
    %v509 = vsel %vm508, %v500, %v505
    %v510 = vmul.f32 %v481, %v509
    %v511 = vmul.f32 %v482, %v509
    %v512 = vmul.f32 %v483, %v509
    %v513 = vmul.f32 %v484, %v509
    %v515 = vperm.slane %v31, 0
    %v516 = vperm.slane %v31, 1
    %v517 = vperm.slane %v31, 2
    %v518 = vperm.slane %v31, 3
    %v523 = vmul.f32 %v510, %v515
    %v524 = vmul.f32 %v511, %v516
    %v525 = vmul.f32 %v512, %v517
    %v526 = vmul.f32 %v513, %v518
    %v528 = vperm.slane %v33, 0
    %v529 = vperm.slane %v33, 1
    %v530 = vperm.slane %v33, 2
    %v531 = vperm.slane %v33, 3
    %v536 = vadd.f32 %v523, %v528
    %v537 = vadd.f32 %v524, %v529
    %v538 = vadd.f32 %v525, %v530
    %v539 = vadd.f32 %v526, %v531
    %v540 = vpack.c.bf16 %v536, %v536
    %v541 = vpack.c.bf16 %v537, %v537
    %v542 = vpack.c.bf16 %v538, %v538
    %v543 = vpack.c.bf16 %v539, %v539
    %v544 = vld [vmem:[%s2] sm:$0xf]
    %v545 = vld [vmem:[%s2 + $0x4] sm:$0xf]
    %v546 = vld [vmem:[%s2 + $0x8] sm:$0xf]
    %v547 = vld [vmem:[%s2 + $0xc] sm:$0xf]
    %v548 = vld [vmem:[%s2 + $0x10] sm:$0xf]
    %v549 = vld [vmem:[%s2 + $0x14] sm:$0xf]
    %v550 = vld [vmem:[%s2 + $0x18] sm:$0xf]
    %v551 = vld [vmem:[%s2 + $0x1c] sm:$0xf]
    %v552 = vld [vmem:[%s2 + $0x20] sm:$0xf]
    %v553 = vld [vmem:[%s2 + $0x24] sm:$0xf]
    %v554 = vld [vmem:[%s2 + $0x28] sm:$0xf]
    %v555 = vld [vmem:[%s2 + $0x2c] sm:$0xf]
    %v556 = vld [vmem:[%s2 + $0x30] sm:$0xf]
    %v557 = vld [vmem:[%s2 + $0x34] sm:$0xf]
    %v558 = vld [vmem:[%s2 + $0x38] sm:$0xf]
    %v559 = vld [vmem:[%s2 + $0x3c] sm:$0xf]
    %v560 = vld [vmem:[%s2 + $0x40] sm:$0xf]
    %v561 = vld [vmem:[%s2 + $0x44] sm:$0xf]
    %v562 = vld [vmem:[%s2 + $0x48] sm:$0xf]
    %v563 = vld [vmem:[%s2 + $0x4c] sm:$0xf]
    %v564 = vld [vmem:[%s2 + $0x50] sm:$0xf]
    %v565 = vld [vmem:[%s2 + $0x54] sm:$0xf]
    %v566 = vld [vmem:[%s2 + $0x58] sm:$0xf]
    %v567 = vld [vmem:[%s2 + $0x5c] sm:$0xf]
    %v568 = vld [vmem:[%s2 + $0x60] sm:$0xf]
    %v569 = vld [vmem:[%s2 + $0x64] sm:$0xf]
    %v570 = vld [vmem:[%s2 + $0x68] sm:$0xf]
    %v571 = vld [vmem:[%s2 + $0x6c] sm:$0xf]
    %v572 = vld [vmem:[%s2 + $0x70] sm:$0xf]
    %v573 = vld [vmem:[%s2 + $0x74] sm:$0xf]
    %v574 = vld [vmem:[%s2 + $0x78] sm:$0xf]
    %v575 = vld [vmem:[%s2 + $0x7c] sm:$0xf]
    %v576 = vld [vmem:[%s2 + $0x80] sm:$0xf]
    %v577 = vld [vmem:[%s2 + $0x84] sm:$0xf]
    %v578 = vld [vmem:[%s2 + $0x88] sm:$0xf]
    %v579 = vld [vmem:[%s2 + $0x8c] sm:$0xf]
    %v580 = vld [vmem:[%s2 + $0x90] sm:$0xf]
    %v581 = vld [vmem:[%s2 + $0x94] sm:$0xf]
    %v582 = vld [vmem:[%s2 + $0x98] sm:$0xf]
    %v583 = vld [vmem:[%s2 + $0x9c] sm:$0xf]
    %v584 = vld [vmem:[%s2 + $0xa0] sm:$0xf]
    %v585 = vld [vmem:[%s2 + $0xa4] sm:$0xf]
    %v586 = vld [vmem:[%s2 + $0xa8] sm:$0xf]
    %v587 = vld [vmem:[%s2 + $0xac] sm:$0xf]
    %v588 = vld [vmem:[%s2 + $0xb0] sm:$0xf]
    %v589 = vld [vmem:[%s2 + $0xb4] sm:$0xf]
    %v590 = vld [vmem:[%s2 + $0xb8] sm:$0xf]
    %v591 = vld [vmem:[%s2 + $0xbc] sm:$0xf]
    %v592 = vld [vmem:[%s2 + $0xc0] sm:$0xf]
    %v593 = vld [vmem:[%s2 + $0xc4] sm:$0xf]
    %v594 = vld [vmem:[%s2 + $0xc8] sm:$0xf]
    %v595 = vld [vmem:[%s2 + $0xcc] sm:$0xf]
    %v596 = vld [vmem:[%s2 + $0xd0] sm:$0xf]
    %v597 = vld [vmem:[%s2 + $0xd4] sm:$0xf]
    %v598 = vld [vmem:[%s2 + $0xd8] sm:$0xf]
    %v599 = vld [vmem:[%s2 + $0xdc] sm:$0xf]
    %v600 = vld [vmem:[%s2 + $0xe0] sm:$0xf]
    %v601 = vld [vmem:[%s2 + $0xe4] sm:$0xf]
    %v602 = vld [vmem:[%s2 + $0xe8] sm:$0xf]
    %v603 = vld [vmem:[%s2 + $0xec] sm:$0xf]
    %v604 = vld [vmem:[%s2 + $0xf0] sm:$0xf]
    %v605 = vld [vmem:[%s2 + $0xf4] sm:$0xf]
    %v606 = vld [vmem:[%s2 + $0xf8] sm:$0xf]
    %v607 = vld [vmem:[%s2 + $0xfc] sm:$0xf]
    %v608 = vperm.slane %v37, 0
    %v673 = vunpack.c.l.b16 %v544
    %v674 = vunpack.c.l.b16 %v545
    %v675 = vunpack.c.l.b16 %v546
    %v676 = vunpack.c.l.b16 %v547
    %v677 = vunpack.c.l.b16 %v548
    %v678 = vunpack.c.l.b16 %v549
    %v679 = vunpack.c.l.b16 %v550
    %v680 = vunpack.c.l.b16 %v551
    %v681 = vunpack.c.l.b16 %v552
    %v682 = vunpack.c.l.b16 %v553
    %v683 = vunpack.c.l.b16 %v554
    %v684 = vunpack.c.l.b16 %v555
    %v685 = vunpack.c.l.b16 %v556
    %v686 = vunpack.c.l.b16 %v557
    %v687 = vunpack.c.l.b16 %v558
    %v688 = vunpack.c.l.b16 %v559
    %v689 = vunpack.c.l.b16 %v560
    %v690 = vunpack.c.l.b16 %v561
    %v691 = vunpack.c.l.b16 %v562
    %v692 = vunpack.c.l.b16 %v563
    %v693 = vunpack.c.l.b16 %v564
    %v694 = vunpack.c.l.b16 %v565
    %v695 = vunpack.c.l.b16 %v566
    %v696 = vunpack.c.l.b16 %v567
    %v697 = vunpack.c.l.b16 %v568
    %v698 = vunpack.c.l.b16 %v569
    %v699 = vunpack.c.l.b16 %v570
    %v700 = vunpack.c.l.b16 %v571
    %v701 = vunpack.c.l.b16 %v572
    %v702 = vunpack.c.l.b16 %v573
    %v703 = vunpack.c.l.b16 %v574
    %v704 = vunpack.c.l.b16 %v575
    %v705 = vunpack.c.l.b16 %v576
    %v706 = vunpack.c.l.b16 %v577
    %v707 = vunpack.c.l.b16 %v578
    %v708 = vunpack.c.l.b16 %v579
    %v709 = vunpack.c.l.b16 %v580
    %v710 = vunpack.c.l.b16 %v581
    %v711 = vunpack.c.l.b16 %v582
    %v712 = vunpack.c.l.b16 %v583
    %v713 = vunpack.c.l.b16 %v584
    %v714 = vunpack.c.l.b16 %v585
    %v715 = vunpack.c.l.b16 %v586
    %v716 = vunpack.c.l.b16 %v587
    %v717 = vunpack.c.l.b16 %v588
    %v718 = vunpack.c.l.b16 %v589
    %v719 = vunpack.c.l.b16 %v590
    %v720 = vunpack.c.l.b16 %v591
    %v721 = vunpack.c.l.b16 %v592
    %v722 = vunpack.c.l.b16 %v593
    %v723 = vunpack.c.l.b16 %v594
    %v724 = vunpack.c.l.b16 %v595
    %v725 = vunpack.c.l.b16 %v596
    %v726 = vunpack.c.l.b16 %v597
    %v727 = vunpack.c.l.b16 %v598
    %v728 = vunpack.c.l.b16 %v599
    %v729 = vunpack.c.l.b16 %v600
    %v730 = vunpack.c.l.b16 %v601
    %v731 = vunpack.c.l.b16 %v602
    %v732 = vunpack.c.l.b16 %v603
    %v733 = vunpack.c.l.b16 %v604
    %v734 = vunpack.c.l.b16 %v605
    %v735 = vunpack.c.l.b16 %v606
    %v736 = vunpack.c.l.b16 %v607
    %v737 = vpack.c.b16 %v674, %v673
    %v738 = vpack.c.b16 %v676, %v675
    %v739 = vpack.c.b16 %v678, %v677
    %v740 = vpack.c.b16 %v680, %v679
    %v741 = vpack.c.b16 %v682, %v681
    %v742 = vpack.c.b16 %v684, %v683
    %v743 = vpack.c.b16 %v686, %v685
    %v744 = vpack.c.b16 %v688, %v687
    %v745 = vpack.c.b16 %v690, %v689
    %v746 = vpack.c.b16 %v692, %v691
    %v747 = vpack.c.b16 %v694, %v693
    %v748 = vpack.c.b16 %v696, %v695
    %v749 = vpack.c.b16 %v698, %v697
    %v750 = vpack.c.b16 %v700, %v699
    %v751 = vpack.c.b16 %v702, %v701
    %v752 = vpack.c.b16 %v704, %v703
    %v753 = vpack.c.b16 %v706, %v705
    %v754 = vpack.c.b16 %v708, %v707
    %v755 = vpack.c.b16 %v710, %v709
    %v756 = vpack.c.b16 %v712, %v711
    %v757 = vpack.c.b16 %v714, %v713
    %v758 = vpack.c.b16 %v716, %v715
    %v759 = vpack.c.b16 %v718, %v717
    %v760 = vpack.c.b16 %v720, %v719
    %v761 = vpack.c.b16 %v722, %v721
    %v762 = vpack.c.b16 %v724, %v723
    %v763 = vpack.c.b16 %v726, %v725
    %v764 = vpack.c.b16 %v728, %v727
    %v765 = vpack.c.b16 %v730, %v729
    %v766 = vpack.c.b16 %v732, %v731
    %v767 = vpack.c.b16 %v734, %v733
    %v768 = vpack.c.b16 %v736, %v735
    %801 = vmatpush.bf16.msra.mxu0 %v744
    %802 = vmatpush.bf16.msra.mxu0 %v743
    %803 = vmatpush.bf16.msra.mxu0 %v742
    %804 = vmatpush.bf16.msra.mxu0 %v741
    %805 = vmatpush.bf16.msra.mxu0 %v740
    %806 = vmatpush.bf16.msra.mxu0 %v739
    %807 = vmatpush.bf16.msra.mxu0 %v738
    %808 = vmatpush.bf16.msra.mxu0 %v737
    %809 = vmatmul.bf16.gmra.mxu0 %v540
    %v810 = vpop.f32.mrf.mxu0
    %v811 = vadd.f32 %v608, %v810
    %v812 = vpop.f32.mrf.mxu0
    %813 = vdwg.mxu0
    %814 = vmatpush.bf16.msra.mxu0 %v752
    %815 = vmatpush.bf16.msra.mxu0 %v751
    %816 = vmatpush.bf16.msra.mxu0 %v750
    %817 = vmatpush.bf16.msra.mxu0 %v749
    %818 = vmatpush.bf16.msra.mxu0 %v748
    %819 = vmatpush.bf16.msra.mxu0 %v747
    %820 = vmatpush.bf16.msra.mxu0 %v746
    %821 = vmatpush.bf16.msra.mxu0 %v745
    %822 = vmatmul.bf16.gmra.mxu0 %v541
    %v823 = vpop.f32.mrf.mxu0
    %v824 = vadd.f32 %v811, %v823
    %v825 = vpop.f32.mrf.mxu0
    %826 = vdwg.mxu0
    %827 = vmatpush.bf16.msra.mxu0 %v760
    %828 = vmatpush.bf16.msra.mxu0 %v759
    %829 = vmatpush.bf16.msra.mxu0 %v758
    %830 = vmatpush.bf16.msra.mxu0 %v757
    %831 = vmatpush.bf16.msra.mxu0 %v756
    %832 = vmatpush.bf16.msra.mxu0 %v755
    %833 = vmatpush.bf16.msra.mxu0 %v754
    %834 = vmatpush.bf16.msra.mxu0 %v753
    %835 = vmatmul.bf16.gmra.mxu0 %v542
    %v836 = vpop.f32.mrf.mxu0
    %v837 = vadd.f32 %v824, %v836
    %v838 = vpop.f32.mrf.mxu0
    %839 = vdwg.mxu0
    %840 = vmatpush.bf16.msra.mxu0 %v768
    %841 = vmatpush.bf16.msra.mxu0 %v767
    %842 = vmatpush.bf16.msra.mxu0 %v766
    %843 = vmatpush.bf16.msra.mxu0 %v765
    %844 = vmatpush.bf16.msra.mxu0 %v764
    %845 = vmatpush.bf16.msra.mxu0 %v763
    %846 = vmatpush.bf16.msra.mxu0 %v762
    %847 = vmatpush.bf16.msra.mxu0 %v761
    %848 = vmatmul.bf16.gmra.mxu0 %v543
    %v849 = vpop.f32.mrf.mxu0
    %v850 = vadd.f32 %v837, %v849
    %v851 = vpop.f32.mrf.mxu0
    %852 = vdwg.mxu0
    %853 = vst [vmem:[#allocation2] sm:$0x3] %v850
    // Predicated region
    $region26: #{forward.3} parent=1 // pred_check
      _
    $region27: #{forward.3} parent=1 // pred_check_branch
      %855 = sbr.rel (0) target = $region29
    $region28: #{forward.3} parent=1 // pred_region
      %857 = vsyncadd [#allocation3], 0
      %s859 = sshll.u32 [#allocation2], 4
      %s860 = int_to_ptr.vmem [resolvable:$true] %s859
      %s861 = sshll.u32 %s6, 4
      %s862 = int_to_ptr.hbm [resolvable:$true] %s861
      %864 = dma.vmem_to_hbm [thread:$0]  %s860, 32, %s862, [#allocation3]
    $region29: #{forward.3} parent=1 // pred_fallthru
      _
    // Predicated region
    $region30: #{forward.3} parent=1 // pred_check
      _
    $region31: #{forward.3} parent=1 // pred_check_branch
      %866 = sbr.rel (0) target = $region33
    $region32: #{forward.3} parent=1 // pred_region
      %868 = vsyncadd [#allocation5], 0
      %s870 = sshll.u32 [#allocation4], 4
      %s871 = int_to_ptr.vmem [resolvable:$true] %s870
      %s872 = sshll.u32 %s7, 4
      %s873 = int_to_ptr.hbm [resolvable:$true] %s872
      %875 = dma.vmem_to_hbm [thread:$0]  %s871, 128, %s873, [#allocation5]
    $region33: #{forward.3} parent=1 // pred_fallthru
      _
    // Predicated region
    $region34: #{forward.3} parent=1 // pred_check
      _
    $region35: #{forward.3} parent=1 // pred_check_branch
      %877 = sbr.rel (0) target = $region37
    $region36: #{forward.3} parent=1 // pred_region
      %879 = dma.done [#allocation3], 32
    $region37: #{forward.3} parent=1 // pred_fallthru
      _
    // Predicated region
    $region38: #{forward.3} parent=1 // pred_check
      _
    $region39: #{forward.3} parent=1 // pred_check_branch
      %881 = sbr.rel (0) target = $region41
    $region40: #{forward.3} parent=1 // pred_region
      %883 = dma.done [#allocation5], 128
    $region41: #{forward.3} parent=1 // pred_fallthru
      _
    %884 = vsyncpa [#allocation3], 1
    %885 = vsyncpa [#allocation5], 1

// kernel: forward.2
$region0: #{forward.2}
  #allocation0 [shape = 'u32[]', space=smem, size = 0x4, offset = 0x4, fixed_abs, tag = 'smem constant byte address 0x4 - core index']
  #allocation1 [shape = 'u32[72,128]{1,0:T(1,128)}', space=vmem, size = 0x9000, scoped, tag = 'internal scratch']
  #allocation2 [shape = 'f32[16,512]{1,0:T(8,128)}', space=vmem, size = 0x8000, scoped, tag = 'scratch operand']
  %s0 = inlined_call_operand.vmem [shape: bf16[16,768], index: 0, kind: input, shape index: {}]
  %s1 = inlined_call_operand.vmem [shape: bf16[16,128], index: 1, kind: input, shape index: {}]
  %s2 = inlined_call_operand.vmem [shape: bf16[768,128], index: 2, kind: input, shape index: {}]
  %s3 = inlined_call_operand.vmem [shape: bf16[128,384], index: 3, kind: input, shape index: {}]
  %s4 = inlined_call_operand.vmem [shape: f32[1,512], index: 4, kind: input, shape index: {}]
  %s5 = inlined_call_operand.vmem [shape: bf16[16,512], index: 5, kind: output, shape index: {}]
  %s6 = sld [smem:[#allocation0]]
  $region69: #{forward.2} parent=0
    _
  %s8 = ssub.s32 1, %s6
  %s9 = scalar_select 0, %s8, %s6
  loop: start=0, step=1, limit=4
  $region2: #{forward.2} parent=0 // loop_pre_header
    _
  $region3: #{forward.2} parent=0 // loop_header
    %s11 = sphi 0, %s15
    %p12 = scmp.ge.s32.totalorder %s11, 4
    %s18 = sphi 0, %s30
    %s19 = sphi 0, %s26
    %s20 = sphi 0, %s18
    %s21 = sphi 0, %s19
    %s22 = sphi 0, %s20
    %s23 = sphi 0, %s21
    %s39 = sphi 0, %s41
    %s42 = sphi 0, %s39
    %s43 = sphi 0, %s42
    %s59 = sphi 0, %s43
    %s73 = sphi 0, %s75
    %s76 = sphi 0, %s73
    %s77 = sphi 0, %s76
    %s93 = sphi 0, %s77
    %s103 = sphi 0, %s105
    %s106 = sphi 0, %s103
    %s107 = sphi 0, %s106
    %s123 = sphi 0, %s107
    %s135 = sphi 0, %s137
    %s138 = sphi 0, %s135
    %s139 = sphi 0, %s138
    %s155 = sphi 0, %s139
    %s159 = sphi 0, %s159
    %s161 = sphi 0, %s159
    %s162 = sphi 0, %s161
    %s176 = sphi 0, %s162
    %s182 = sphi 0, %s184
    %s185 = sphi 0, %s182
    %s186 = sphi 0, %s185
    %s202 = sphi 0, %s186
  $region4: #{forward.2} parent=0 // loop_header_branch
    %14 = sbr.rel (%p12) target = $region8
  $region5: #{forward.2} parent=0 // loop_body
    %s16 = ssub.s32 %s11, 1
    %s17 = ssub.s32 %s11, 2
    %s24 = sadd.s32 1, %s19
    %p25 = scmp.ge.s32.totalorder %s24, 2
    %s26 = scalar_select %p25, 0, %s24
    %s27 = sadd.s32 1, %s18
    %s28 = scalar_select %p25, %s27, %s18
    %p29 = scmp.ge.s32.totalorder %s28, 1
    %s30 = scalar_select %p29, 0, %s28
    %p31 = scmp.lt.s32.totalorder %s19, 0
    %s32 = scalar_select %p31, %s19, 0
    %p33 = scmp.lt.s32.totalorder %s26, 0
    %s34 = scalar_select %p33, %s26, 0
    %s35 = ssub.s32 %s18, %s30
    %s36 = ssub.s32 %s32, %s34
    %s37 = sor.u32 %s35, %s36
    %p38 = scmp.eq.s32.totalorder %s37, 0
    %s40 = sadd.s32 %s39, 1
    %s41 = scalar_select %p38, %s39, %s40
    %p44 = pneg %p38
    %p45 = scmp.eq.s32.totalorder %s11, 1
    %p46 = por %p44, %p45
    %p47 = scmp.ne.s32.totalorder %s39, %s42
    %p48 = scmp.eq.s32.totalorder %s11, 0
    %p49 = por %p47, %p48
    %p50 = scmp.ne.s32.totalorder %s39, %s42
    %p51 = scmp.eq.s32.totalorder %s16, 1
    %p52 = por %p50, %p51
    %p53 = scmp.ne.s32.totalorder %s42, %s43
    %p54 = scmp.eq.s32.totalorder %s16, 0
    %p55 = por %p53, %p54
    %p56 = scmp.ne.s32.totalorder %s42, %s43
    %p57 = scmp.eq.s32.totalorder %s17, 1
    %p58 = por %p56, %p57
    %p60 = scmp.ne.s32.totalorder %s43, %s59
    %p61 = scmp.eq.s32.totalorder %s17, 0
    %p62 = por %p60, %p61
    %s63 = ssub.s32 %s19, 1
    %p64 = scmp.gt.s32.totalorder %s63, 0
    %s65 = scalar_select %p64, %s63, 0
    %s66 = ssub.s32 %s26, 1
    %p67 = scmp.gt.s32.totalorder %s66, 0
    %s68 = scalar_select %p67, %s66, 0
    %s69 = ssub.s32 %s18, %s30
    %s70 = ssub.s32 %s65, %s68
    %s71 = sor.u32 %s69, %s70
    %p72 = scmp.eq.s32.totalorder %s71, 0
    %s74 = sadd.s32 %s73, 1
    %s75 = scalar_select %p72, %s73, %s74
    %p78 = pneg %p72
    %p79 = scmp.eq.s32.totalorder %s11, 1
    %p80 = por %p78, %p79
    %p81 = scmp.ne.s32.totalorder %s73, %s76
    %p82 = scmp.eq.s32.totalorder %s11, 0
    %p83 = por %p81, %p82
    %p84 = scmp.ne.s32.totalorder %s73, %s76
    %p85 = scmp.eq.s32.totalorder %s16, 1
    %p86 = por %p84, %p85
    %p87 = scmp.ne.s32.totalorder %s76, %s77
    %p88 = scmp.eq.s32.totalorder %s16, 0
    %p89 = por %p87, %p88
    %p90 = scmp.ne.s32.totalorder %s76, %s77
    %p91 = scmp.eq.s32.totalorder %s17, 1
    %p92 = por %p90, %p91
    %p94 = scmp.ne.s32.totalorder %s77, %s93
    %p95 = scmp.eq.s32.totalorder %s17, 0
    %p96 = por %p94, %p95
    %p97 = scmp.lt.s32.totalorder %s19, 0
    %s98 = scalar_select %p97, %s19, 0
    %p99 = scmp.lt.s32.totalorder %s26, 0
    %s100 = scalar_select %p99, %s26, 0
    %s101 = ssub.s32 %s98, %s100
    %p102 = scmp.eq.s32.totalorder %s101, 0
    %s104 = sadd.s32 %s103, 1
    %s105 = scalar_select %p102, %s103, %s104
    %p108 = pneg %p102
    %p109 = scmp.eq.s32.totalorder %s11, 1
    %p110 = por %p108, %p109
    %p111 = scmp.ne.s32.totalorder %s103, %s106
    %p112 = scmp.eq.s32.totalorder %s11, 0
    %p113 = por %p111, %p112
    %p114 = scmp.ne.s32.totalorder %s103, %s106
    %p115 = scmp.eq.s32.totalorder %s16, 1
    %p116 = por %p114, %p115
    %p117 = scmp.ne.s32.totalorder %s106, %s107
    %p118 = scmp.eq.s32.totalorder %s16, 0
    %p119 = por %p117, %p118
    %p120 = scmp.ne.s32.totalorder %s106, %s107
    %p121 = scmp.eq.s32.totalorder %s17, 1
    %p122 = por %p120, %p121
    %p124 = scmp.ne.s32.totalorder %s107, %s123
    %p125 = scmp.eq.s32.totalorder %s17, 0
    %p126 = por %p124, %p125
    %s127 = ssub.s32 %s19, 1
    %p128 = scmp.gt.s32.totalorder %s127, 0
    %s129 = scalar_select %p128, %s127, 0
    %s130 = ssub.s32 %s26, 1
    %p131 = scmp.gt.s32.totalorder %s130, 0
    %s132 = scalar_select %p131, %s130, 0
    %s133 = ssub.s32 %s129, %s132
    %p134 = scmp.eq.s32.totalorder %s133, 0
    %s136 = sadd.s32 %s135, 1
    %s137 = scalar_select %p134, %s135, %s136
    %p140 = pneg %p134
    %p141 = scmp.eq.s32.totalorder %s11, 1
    %p142 = por %p140, %p141
    %p143 = scmp.ne.s32.totalorder %s135, %s138
    %p144 = scmp.eq.s32.totalorder %s11, 0
    %p145 = por %p143, %p144
    %p146 = scmp.ne.s32.totalorder %s135, %s138
    %p147 = scmp.eq.s32.totalorder %s16, 1
    %p148 = por %p146, %p147
    %p149 = scmp.ne.s32.totalorder %s138, %s139
    %p150 = scmp.eq.s32.totalorder %s16, 0
    %p151 = por %p149, %p150
    %p152 = scmp.ne.s32.totalorder %s138, %s139
    %p153 = scmp.eq.s32.totalorder %s17, 1
    %p154 = por %p152, %p153
    %p156 = scmp.ne.s32.totalorder %s139, %s155
    %p157 = scmp.eq.s32.totalorder %s17, 0
    %p158 = por %p156, %p157
    %s160 = sadd.s32 %s159, 1
    %p163 = scmp.eq.s32.totalorder %s11, 1
    %p164 = scmp.ne.s32.totalorder %s159, %s161
    %p165 = scmp.eq.s32.totalorder %s11, 0
    %p166 = por %p164, %p165
    %p167 = scmp.ne.s32.totalorder %s159, %s161
    %p168 = scmp.eq.s32.totalorder %s16, 1
    %p169 = por %p167, %p168
    %p170 = scmp.ne.s32.totalorder %s161, %s162
    %p171 = scmp.eq.s32.totalorder %s16, 0
    %p172 = por %p170, %p171
    %p173 = scmp.ne.s32.totalorder %s161, %s162
    %p174 = scmp.eq.s32.totalorder %s17, 1
    %p175 = por %p173, %p174
    %p177 = scmp.ne.s32.totalorder %s162, %s176
    %p178 = scmp.eq.s32.totalorder %s17, 0
    %p179 = por %p177, %p178
    %s180 = ssub.s32 %s18, %s30
    %p181 = scmp.eq.s32.totalorder %s180, 0
    %s183 = sadd.s32 %s182, 1
    %s184 = scalar_select %p181, %s182, %s183
    %p187 = pneg %p181
    %p188 = scmp.eq.s32.totalorder %s11, 1
    %p189 = por %p187, %p188
    %p190 = scmp.ne.s32.totalorder %s182, %s185
    %p191 = scmp.eq.s32.totalorder %s11, 0
    %p192 = por %p190, %p191
    %p193 = scmp.ne.s32.totalorder %s182, %s185
    %p194 = scmp.eq.s32.totalorder %s16, 1
    %p195 = por %p193, %p194
    %p196 = scmp.ne.s32.totalorder %s185, %s186
    %p197 = scmp.eq.s32.totalorder %s16, 0
    %p198 = por %p196, %p197
    %p199 = scmp.ne.s32.totalorder %s185, %s186
    %p200 = scmp.eq.s32.totalorder %s17, 1
    %p201 = por %p199, %p200
    %p203 = scmp.ne.s32.totalorder %s186, %s202
    %p204 = scmp.eq.s32.totalorder %s17, 0
    %p205 = por %p203, %p204
    %p206 = scmp.le.s32.totalorder 1, %s11
    %p207 = scmp.lt.s32.totalorder %s11, 3
    %p208 = pnand %p206, %p207
    %p209 = pneg %p208
    // Predicated region
    $region9: #{forward.2} parent=5 // pred_check
      _
    $region10: #{forward.2} parent=5 // pred_check_branch
      %211 = sbr.rel (%p208) target = $region12
    $region11: #{forward.2} parent=5 // pred_region
      %s212 = ssub.s32 %s11, 1
      // Predicated region
      $region13: #{forward.2} parent=11 // pred_check
        %p213 = pneg %p172
      $region14: #{forward.2} parent=11 // pred_check_branch
        %215 = sbr.rel (%p213) target = $region16
      $region15: #{forward.2} parent=11 // pred_region
        _
      $region16: #{forward.2} parent=11 // pred_fallthru
        _
    $region12: #{forward.2} parent=5 // pred_fallthru
      _
    %p216 = scmp.lt.s32.totalorder %s11, 2
    // Predicated region
    $region17: #{forward.2} parent=5 // pred_check
      %p217 = pneg %p216
    $region18: #{forward.2} parent=5 // pred_check_branch
      %219 = sbr.rel (%p217) target = $region20
    $region19: #{forward.2} parent=5 // pred_region
      // Predicated region
      $region21: #{forward.2} parent=19 // pred_check
        %p220 = pneg %p49
      $region22: #{forward.2} parent=19 // pred_check_branch
        %222 = sbr.rel (%p220) target = $region24
      $region23: #{forward.2} parent=19 // pred_region
        %p223 = scmp.lt.s32.totalorder %s19, 0
        %s224 = scalar_select %p223, %s19, 0
        %s225 = smul.u32 2, %s18
        %s226 = smul.u32 6, %s224
        %p227 = scmp.lt.s32.totalorder %s225, 1
        %s228 = scalar_select %p227, %s225, 1
        %p229 = scmp.lt.s32.totalorder %s226, 5
        %s230 = scalar_select %p229, %s226, 5
        %s231 = smul.addr %s228, 6
        %s232 = sadd.s32 %s230, %s231
        %s233 = smul.addr %s232, 4
        %s234 = scalar_lea.vmem %s0, %s233
        %p235 = scmp.lt.s32.totalorder %s19, 0
        %s236 = scalar_select %p235, %s19, 0
        %s237 = smul.u32 2, %s18
        %s238 = smul.u32 6, %s236
      $region24: #{forward.2} parent=19 // pred_fallthru
        _
      // Predicated region
      $region25: #{forward.2} parent=19 // pred_check
        %p239 = pneg %p83
      $region26: #{forward.2} parent=19 // pred_check_branch
        %241 = sbr.rel (%p239) target = $region28
      $region27: #{forward.2} parent=19 // pred_region
        %s242 = ssub.s32 %s19, 1
        %p243 = scmp.gt.s32.totalorder %s242, 0
        %s244 = scalar_select %p243, %s242, 0
        %s245 = smul.u32 2, %s18
        %p246 = scmp.lt.s32.totalorder %s245, 1
        %s247 = scalar_select %p246, %s245, 1
        %p248 = scmp.lt.s32.totalorder %s244, 0
        %s249 = scalar_select %p248, %s244, 0
        %s250 = sadd.s32 %s249, %s247
        %s251 = smul.addr %s250, 4
        %s252 = scalar_lea.vmem %s1, %s251
        %s253 = ssub.s32 %s19, 1
        %p254 = scmp.gt.s32.totalorder %s253, 0
        %s255 = scalar_select %p254, %s253, 0
        %s256 = smul.u32 2, %s18
      $region28: #{forward.2} parent=19 // pred_fallthru
        _
      // Predicated region
      $region29: #{forward.2} parent=19 // pred_check
        %p257 = pneg %p113
      $region30: #{forward.2} parent=19 // pred_check_branch
        %259 = sbr.rel (%p257) target = $region32
      $region31: #{forward.2} parent=19 // pred_region
        %p260 = scmp.lt.s32.totalorder %s19, 0
        %s261 = scalar_select %p260, %s19, 0
        %s262 = smul.u32 96, %s261
        %p263 = scmp.lt.s32.totalorder %s262, 95
        %s264 = scalar_select %p263, %s262, 95
        %s265 = smul.addr %s264, 4
        %s266 = scalar_lea.vmem %s2, %s265
        %p267 = scmp.lt.s32.totalorder %s19, 0
        %s268 = scalar_select %p267, %s19, 0
        %s269 = smul.u32 96, %s268
      $region32: #{forward.2} parent=19 // pred_fallthru
        _
      // Predicated region
      $region33: #{forward.2} parent=19 // pred_check
        %p270 = pneg %p145
      $region34: #{forward.2} parent=19 // pred_check_branch
        %272 = sbr.rel (%p270) target = $region36
      $region35: #{forward.2} parent=19 // pred_region
        %s273 = ssub.s32 %s19, 1
        %p274 = scmp.gt.s32.totalorder %s273, 0
        %s275 = scalar_select %p274, %s273, 0
        %s276 = smul.u32 16, %s275
        %p277 = scmp.lt.s32.totalorder %s276, 15
        %s278 = scalar_select %p277, %s276, 15
        %s279 = smul.addr %s278, 3
        %s280 = smul.addr %s279, 4
        %s281 = scalar_lea.vmem %s3, %s280
        %s282 = ssub.s32 %s19, 1
        %p283 = scmp.gt.s32.totalorder %s282, 0
        %s284 = scalar_select %p283, %s282, 0
        %s285 = smul.u32 16, %s284
      $region36: #{forward.2} parent=19 // pred_fallthru
        _
    $region20: #{forward.2} parent=5 // pred_fallthru
      _
    %p286 = scmp.le.s32.totalorder 1, %s11
    %p287 = scmp.lt.s32.totalorder %s11, 3
    %p288 = pnand %p286, %p287
    %p289 = pneg %p288
    // Predicated region
    $region37: #{forward.2} parent=5 // pred_check
      _
    $region38: #{forward.2} parent=5 // pred_check_branch
      %291 = sbr.rel (%p288) target = $region40
    $region39: #{forward.2} parent=5 // pred_region
      %s292 = ssub.s32 %s11, 1
      %p293 = scmp.lt.s32.totalorder %s21, 0
      %s294 = scalar_select %p293, %s21, 0
      %s295 = smul.u32 2, %s20
      %s296 = smul.u32 6, %s294
      %p297 = scmp.lt.s32.totalorder %s295, 1
      %s298 = scalar_select %p297, %s295, 1
      %p299 = scmp.lt.s32.totalorder %s296, 5
      %s300 = scalar_select %p299, %s296, 5
      %s301 = smul.addr %s298, 6
      %s302 = sadd.s32 %s300, %s301
      %s303 = smul.addr %s302, 4
      %s304 = scalar_lea.vmem %s0, %s303
      %p305 = pneg %p55
      %p306 = pneg %p52
      %s307 = ssub.s32 %s21, 1
      %p308 = scmp.gt.s32.totalorder %s307, 0
      %s309 = scalar_select %p308, %s307, 0
      %s310 = smul.u32 2, %s20
      %p311 = scmp.lt.s32.totalorder %s310, 1
      %s312 = scalar_select %p311, %s310, 1
      %p313 = scmp.lt.s32.totalorder %s309, 0
      %s314 = scalar_select %p313, %s309, 0
      %s315 = sadd.s32 %s314, %s312
      %s316 = smul.addr %s315, 4
      %s317 = scalar_lea.vmem %s1, %s316
      %p318 = pneg %p89
      %p319 = pneg %p86
      %p320 = scmp.lt.s32.totalorder %s21, 0
      %s321 = scalar_select %p320, %s21, 0
      %s322 = smul.u32 96, %s321
      %p323 = scmp.lt.s32.totalorder %s322, 95
      %s324 = scalar_select %p323, %s322, 95
      %s325 = smul.addr %s324, 4
      %s326 = scalar_lea.vmem %s2, %s325
      %p327 = pneg %p119
      %p328 = pneg %p116
      %s329 = ssub.s32 %s21, 1
      %p330 = scmp.gt.s32.totalorder %s329, 0
      %s331 = scalar_select %p330, %s329, 0
      %s332 = smul.u32 16, %s331
      %p333 = scmp.lt.s32.totalorder %s332, 15
      %s334 = scalar_select %p333, %s332, 15
      %s335 = smul.addr %s334, 3
      %s336 = smul.addr %s335, 4
      %s337 = scalar_lea.vmem %s3, %s336
      %p338 = pneg %p151
      %p339 = pneg %p148
      %p340 = pneg %p172
      %p341 = pneg %p169
      %p342 = pneg %p198
      %p343 = pneg %p195
      %s344 = smul.u32 2, %s20
      %p345 = scmp.lt.s32.totalorder %s344, 1
      %s346 = scalar_select %p345, %s344, 1
      %s347 = smul.addr %s346, 4
      %s348 = smul.addr %s347, 4
      %s349 = scalar_lea.vmem %s5, %s348
      %p350 = scmp.lt.s32.totalorder %s21, 0
      %s351 = scalar_select %p350, %s21, 0
      %s352 = smul.u32 2, %s20
      %s353 = smul.u32 6, %s351
      %p354 = scmp.lt.s32.totalorder %s352, 1
      %s355 = scalar_select %p354, %s352, 1
      %p356 = scmp.lt.s32.totalorder %s353, 5
      %s357 = scalar_select %p356, %s353, 5
      %s358 = smul.addr %s355, 6
      %s359 = sadd.s32 %s357, %s358
      %s360 = smul.addr %s359, 4
      %s361 = scalar_lea.vmem %s0, %s360
      %p362 = scmp.lt.s32.totalorder %s21, 0
      %s363 = scalar_select %p362, %s21, 0
      %s364 = smul.u32 2, %s20
      %s365 = smul.u32 6, %s363
      %s366 = ssub.s32 %s21, 1
      %p367 = scmp.gt.s32.totalorder %s366, 0
      %s368 = scalar_select %p367, %s366, 0
      %s369 = smul.u32 2, %s20
      %p370 = scmp.lt.s32.totalorder %s369, 1
      %s371 = scalar_select %p370, %s369, 1
      %p372 = scmp.lt.s32.totalorder %s368, 0
      %s373 = scalar_select %p372, %s368, 0
      %s374 = sadd.s32 %s373, %s371
      %s375 = smul.addr %s374, 4
      %s376 = scalar_lea.vmem %s1, %s375
      %s377 = ssub.s32 %s21, 1
      %p378 = scmp.gt.s32.totalorder %s377, 0
      %s379 = scalar_select %p378, %s377, 0
      %s380 = smul.u32 2, %s20
      %p381 = scmp.lt.s32.totalorder %s21, 0
      %s382 = scalar_select %p381, %s21, 0
      %s383 = smul.u32 96, %s382
      %p384 = scmp.lt.s32.totalorder %s383, 95
      %s385 = scalar_select %p384, %s383, 95
      %s386 = smul.addr %s385, 4
      %s387 = scalar_lea.vmem %s2, %s386
      %p388 = scmp.lt.s32.totalorder %s21, 0
      %s389 = scalar_select %p388, %s21, 0
      %s390 = smul.u32 96, %s389
      %s391 = ssub.s32 %s21, 1
      %p392 = scmp.gt.s32.totalorder %s391, 0
      %s393 = scalar_select %p392, %s391, 0
      %s394 = smul.u32 16, %s393
      %p395 = scmp.lt.s32.totalorder %s394, 15
      %s396 = scalar_select %p395, %s394, 15
      %s397 = smul.addr %s396, 3
      %s398 = smul.addr %s397, 4
      %s399 = scalar_lea.vmem %s3, %s398
      %s400 = ssub.s32 %s21, 1
      %p401 = scmp.gt.s32.totalorder %s400, 0
      %s402 = scalar_select %p401, %s400, 0
      %s403 = smul.u32 16, %s402
      %s404 = smul.u32 2, %s20
      %p405 = scmp.lt.s32.totalorder %s404, 1
      %s406 = scalar_select %p405, %s404, 1
      %s407 = smul.addr %s406, 4
      %s408 = smul.addr %s407, 4
      %s409 = scalar_lea.vmem %s5, %s408
      %s410 = smul.u32 2, %s20
      %p411 = scmp.eq.s32.totalorder %s21, 0
      // Predicated region
      $region41: #{forward.2} parent=39 // pred_check
        %p412 = pneg %p411
      $region42: #{forward.2} parent=39 // pred_check_branch
        %414 = sbr.rel (%p412) target = $region44
      $region43: #{forward.2} parent=39 // pred_region
        %v415 = vld [vmem:[%s4] sm:$0xf]
        %v417 = vperm.slane %v415, 0
        %v418 = vperm.slane %v415, 1
        %v419 = vperm.slane %v415, 2
        %v420 = vperm.slane %v415, 3
        %425 = vst [vmem:[#allocation2] sm:$0xff] %v417
        %426 = vst [vmem:[#allocation2 + $0x8] sm:$0xff] %v418
        %427 = vst [vmem:[#allocation2 + $0x10] sm:$0xff] %v419
        %428 = vst [vmem:[#allocation2 + $0x18] sm:$0xff] %v420
        %429 = vst [vmem:[#allocation2 + $0x20] sm:$0xff] %v417
        %430 = vst [vmem:[#allocation2 + $0x28] sm:$0xff] %v418
        %431 = vst [vmem:[#allocation2 + $0x30] sm:$0xff] %v419
        %432 = vst [vmem:[#allocation2 + $0x38] sm:$0xff] %v420
      $region44: #{forward.2} parent=39 // pred_fallthru
        _
      %p433 = scmp.lt.s32.totalorder %s21, 1
      // Predicated region
      $region45: #{forward.2} parent=39 // pred_check
        %p434 = pneg %p433
      $region46: #{forward.2} parent=39 // pred_check_branch
        %436 = sbr.rel (%p434) target = $region48
      $region47: #{forward.2} parent=39 // pred_region
        %v437 = vld [vmem:[#allocation2] sm:$0xff]
        %v438 = vld [vmem:[#allocation2 + $0x20] sm:$0xff]
        %v439 = vld [vmem:[%s361] sm:$0xff]
        %v440 = vld [vmem:[%s361 + $0x8] sm:$0xff]
        %v441 = vld [vmem:[%s361 + $0x10] sm:$0xff]
        %v442 = vld [vmem:[%s361 + $0x18] sm:$0xff]
        %v443 = vld [vmem:[%s361 + $0x20] sm:$0xff]
        %v444 = vld [vmem:[%s361 + $0x28] sm:$0xff]
        %v445 = vld [vmem:[%s387] sm:$0xf]
        %v446 = vld [vmem:[%s387 + $0x4] sm:$0xf]
        %v447 = vld [vmem:[%s387 + $0x8] sm:$0xf]
        %v448 = vld [vmem:[%s387 + $0xc] sm:$0xf]
        %v449 = vld [vmem:[%s387 + $0x10] sm:$0xf]
        %v450 = vld [vmem:[%s387 + $0x14] sm:$0xf]
        %v451 = vld [vmem:[%s387 + $0x18] sm:$0xf]
        %v452 = vld [vmem:[%s387 + $0x1c] sm:$0xf]
        %v453 = vld [vmem:[%s387 + $0x20] sm:$0xf]
        %v454 = vld [vmem:[%s387 + $0x24] sm:$0xf]
        %v455 = vld [vmem:[%s387 + $0x28] sm:$0xf]
        %v456 = vld [vmem:[%s387 + $0x2c] sm:$0xf]
        %v457 = vld [vmem:[%s387 + $0x30] sm:$0xf]
        %v458 = vld [vmem:[%s387 + $0x34] sm:$0xf]
        %v459 = vld [vmem:[%s387 + $0x38] sm:$0xf]
        %v460 = vld [vmem:[%s387 + $0x3c] sm:$0xf]
        %v461 = vld [vmem:[%s387 + $0x40] sm:$0xf]
        %v462 = vld [vmem:[%s387 + $0x44] sm:$0xf]
        %v463 = vld [vmem:[%s387 + $0x48] sm:$0xf]
        %v464 = vld [vmem:[%s387 + $0x4c] sm:$0xf]
        %v465 = vld [vmem:[%s387 + $0x50] sm:$0xf]
        %v466 = vld [vmem:[%s387 + $0x54] sm:$0xf]
        %v467 = vld [vmem:[%s387 + $0x58] sm:$0xf]
        %v468 = vld [vmem:[%s387 + $0x5c] sm:$0xf]
        %v469 = vld [vmem:[%s387 + $0x60] sm:$0xf]
        %v470 = vld [vmem:[%s387 + $0x64] sm:$0xf]
        %v471 = vld [vmem:[%s387 + $0x68] sm:$0xf]
        %v472 = vld [vmem:[%s387 + $0x6c] sm:$0xf]
        %v473 = vld [vmem:[%s387 + $0x70] sm:$0xf]
        %v474 = vld [vmem:[%s387 + $0x74] sm:$0xf]
        %v475 = vld [vmem:[%s387 + $0x78] sm:$0xf]
        %v476 = vld [vmem:[%s387 + $0x7c] sm:$0xf]
        %v477 = vld [vmem:[%s387 + $0x80] sm:$0xf]
        %v478 = vld [vmem:[%s387 + $0x84] sm:$0xf]
        %v479 = vld [vmem:[%s387 + $0x88] sm:$0xf]
        %v480 = vld [vmem:[%s387 + $0x8c] sm:$0xf]
        %v481 = vld [vmem:[%s387 + $0x90] sm:$0xf]
        %v482 = vld [vmem:[%s387 + $0x94] sm:$0xf]
        %v483 = vld [vmem:[%s387 + $0x98] sm:$0xf]
        %v484 = vld [vmem:[%s387 + $0x9c] sm:$0xf]
        %v485 = vld [vmem:[%s387 + $0xa0] sm:$0xf]
        %v486 = vld [vmem:[%s387 + $0xa4] sm:$0xf]
        %v487 = vld [vmem:[%s387 + $0xa8] sm:$0xf]
        %v488 = vld [vmem:[%s387 + $0xac] sm:$0xf]
        %v489 = vld [vmem:[%s387 + $0xb0] sm:$0xf]
        %v490 = vld [vmem:[%s387 + $0xb4] sm:$0xf]
        %v491 = vld [vmem:[%s387 + $0xb8] sm:$0xf]
        %v492 = vld [vmem:[%s387 + $0xbc] sm:$0xf]
        %v493 = vld [vmem:[%s387 + $0xc0] sm:$0xf]
        %v494 = vld [vmem:[%s387 + $0xc4] sm:$0xf]
        %v495 = vld [vmem:[%s387 + $0xc8] sm:$0xf]
        %v496 = vld [vmem:[%s387 + $0xcc] sm:$0xf]
        %v497 = vld [vmem:[%s387 + $0xd0] sm:$0xf]
        %v498 = vld [vmem:[%s387 + $0xd4] sm:$0xf]
        %v499 = vld [vmem:[%s387 + $0xd8] sm:$0xf]
        %v500 = vld [vmem:[%s387 + $0xdc] sm:$0xf]
        %v501 = vld [vmem:[%s387 + $0xe0] sm:$0xf]
        %v502 = vld [vmem:[%s387 + $0xe4] sm:$0xf]
        %v503 = vld [vmem:[%s387 + $0xe8] sm:$0xf]
        %v504 = vld [vmem:[%s387 + $0xec] sm:$0xf]
        %v505 = vld [vmem:[%s387 + $0xf0] sm:$0xf]
        %v506 = vld [vmem:[%s387 + $0xf4] sm:$0xf]
        %v507 = vld [vmem:[%s387 + $0xf8] sm:$0xf]
        %v508 = vld [vmem:[%s387 + $0xfc] sm:$0xf]
        %v509 = vld [vmem:[%s387 + $0x100] sm:$0xf]
        %v510 = vld [vmem:[%s387 + $0x104] sm:$0xf]
        %v511 = vld [vmem:[%s387 + $0x108] sm:$0xf]
        %v512 = vld [vmem:[%s387 + $0x10c] sm:$0xf]
        %v513 = vld [vmem:[%s387 + $0x110] sm:$0xf]
        %v514 = vld [vmem:[%s387 + $0x114] sm:$0xf]
        %v515 = vld [vmem:[%s387 + $0x118] sm:$0xf]
        %v516 = vld [vmem:[%s387 + $0x11c] sm:$0xf]
        %v517 = vld [vmem:[%s387 + $0x120] sm:$0xf]
        %v518 = vld [vmem:[%s387 + $0x124] sm:$0xf]
        %v519 = vld [vmem:[%s387 + $0x128] sm:$0xf]
        %v520 = vld [vmem:[%s387 + $0x12c] sm:$0xf]
        %v521 = vld [vmem:[%s387 + $0x130] sm:$0xf]
        %v522 = vld [vmem:[%s387 + $0x134] sm:$0xf]
        %v523 = vld [vmem:[%s387 + $0x138] sm:$0xf]
        %v524 = vld [vmem:[%s387 + $0x13c] sm:$0xf]
        %v525 = vld [vmem:[%s387 + $0x140] sm:$0xf]
        %v526 = vld [vmem:[%s387 + $0x144] sm:$0xf]
        %v527 = vld [vmem:[%s387 + $0x148] sm:$0xf]
        %v528 = vld [vmem:[%s387 + $0x14c] sm:$0xf]
        %v529 = vld [vmem:[%s387 + $0x150] sm:$0xf]
        %v530 = vld [vmem:[%s387 + $0x154] sm:$0xf]
        %v531 = vld [vmem:[%s387 + $0x158] sm:$0xf]
        %v532 = vld [vmem:[%s387 + $0x15c] sm:$0xf]
        %v533 = vld [vmem:[%s387 + $0x160] sm:$0xf]
        %v534 = vld [vmem:[%s387 + $0x164] sm:$0xf]
        %v535 = vld [vmem:[%s387 + $0x168] sm:$0xf]
        %v536 = vld [vmem:[%s387 + $0x16c] sm:$0xf]
        %v537 = vld [vmem:[%s387 + $0x170] sm:$0xf]
        %v538 = vld [vmem:[%s387 + $0x174] sm:$0xf]
        %v539 = vld [vmem:[%s387 + $0x178] sm:$0xf]
        %v540 = vld [vmem:[%s387 + $0x17c] sm:$0xf]
        %v547 = vunpack.c.l.b16 %v439
        %v548 = vunpack.c.h.b16 %v439
        %v549 = vunpack.c.l.b16 %v440
        %v550 = vunpack.c.h.b16 %v440
        %v551 = vunpack.c.l.b16 %v441
        %v552 = vunpack.c.h.b16 %v441
        %v553 = vunpack.c.l.b16 %v442
        %v554 = vunpack.c.h.b16 %v442
        %v555 = vunpack.c.l.b16 %v443
        %v556 = vunpack.c.h.b16 %v443
        %v557 = vunpack.c.l.b16 %v444
        %v558 = vunpack.c.h.b16 %v444
        %v559 = vpack.c.b16 %v553, %v547
        %v560 = vpack.c.b16 %v554, %v548
        %v561 = vpack.c.b16 %v555, %v549
        %v562 = vpack.c.b16 %v556, %v550
        %v563 = vpack.c.b16 %v557, %v551
        %v564 = vpack.c.b16 %v558, %v552
        %v667 = vunpack.c.l.b16 %v445
        %v668 = vunpack.c.l.b16 %v446
        %v669 = vunpack.c.l.b16 %v447
        %v670 = vunpack.c.l.b16 %v448
        %v671 = vunpack.c.l.b16 %v449
        %v672 = vunpack.c.l.b16 %v450
        %v673 = vunpack.c.l.b16 %v451
        %v674 = vunpack.c.l.b16 %v452
        %v675 = vunpack.c.l.b16 %v453
        %v676 = vunpack.c.l.b16 %v454
        %v677 = vunpack.c.l.b16 %v455
        %v678 = vunpack.c.l.b16 %v456
        %v679 = vunpack.c.l.b16 %v457
        %v680 = vunpack.c.l.b16 %v458
        %v681 = vunpack.c.l.b16 %v459
        %v682 = vunpack.c.l.b16 %v460
        %v683 = vunpack.c.l.b16 %v461
        %v684 = vunpack.c.l.b16 %v462
        %v685 = vunpack.c.l.b16 %v463
        %v686 = vunpack.c.l.b16 %v464
        %v687 = vunpack.c.l.b16 %v465
        %v688 = vunpack.c.l.b16 %v466
        %v689 = vunpack.c.l.b16 %v467
        %v690 = vunpack.c.l.b16 %v468
        %v691 = vunpack.c.l.b16 %v469
        %v692 = vunpack.c.l.b16 %v470
        %v693 = vunpack.c.l.b16 %v471
        %v694 = vunpack.c.l.b16 %v472
        %v695 = vunpack.c.l.b16 %v473
        %v696 = vunpack.c.l.b16 %v474
        %v697 = vunpack.c.l.b16 %v475
        %v698 = vunpack.c.l.b16 %v476
        %v699 = vunpack.c.l.b16 %v477
        %v700 = vunpack.c.l.b16 %v478
        %v701 = vunpack.c.l.b16 %v479
        %v702 = vunpack.c.l.b16 %v480
        %v703 = vunpack.c.l.b16 %v481
        %v704 = vunpack.c.l.b16 %v482
        %v705 = vunpack.c.l.b16 %v483
        %v706 = vunpack.c.l.b16 %v484
        %v707 = vunpack.c.l.b16 %v485
        %v708 = vunpack.c.l.b16 %v486
        %v709 = vunpack.c.l.b16 %v487
        %v710 = vunpack.c.l.b16 %v488
        %v711 = vunpack.c.l.b16 %v489
        %v712 = vunpack.c.l.b16 %v490
        %v713 = vunpack.c.l.b16 %v491
        %v714 = vunpack.c.l.b16 %v492
        %v715 = vunpack.c.l.b16 %v493
        %v716 = vunpack.c.l.b16 %v494
        %v717 = vunpack.c.l.b16 %v495
        %v718 = vunpack.c.l.b16 %v496
        %v719 = vunpack.c.l.b16 %v497
        %v720 = vunpack.c.l.b16 %v498
        %v721 = vunpack.c.l.b16 %v499
        %v722 = vunpack.c.l.b16 %v500
        %v723 = vunpack.c.l.b16 %v501
        %v724 = vunpack.c.l.b16 %v502
        %v725 = vunpack.c.l.b16 %v503
        %v726 = vunpack.c.l.b16 %v504
        %v727 = vunpack.c.l.b16 %v505
        %v728 = vunpack.c.l.b16 %v506
        %v729 = vunpack.c.l.b16 %v507
        %v730 = vunpack.c.l.b16 %v508
        %v731 = vunpack.c.l.b16 %v509
        %v732 = vunpack.c.l.b16 %v510
        %v733 = vunpack.c.l.b16 %v511
        %v734 = vunpack.c.l.b16 %v512
        %v735 = vunpack.c.l.b16 %v513
        %v736 = vunpack.c.l.b16 %v514
        %v737 = vunpack.c.l.b16 %v515
        %v738 = vunpack.c.l.b16 %v516
        %v739 = vunpack.c.l.b16 %v517
        %v740 = vunpack.c.l.b16 %v518
        %v741 = vunpack.c.l.b16 %v519
        %v742 = vunpack.c.l.b16 %v520
        %v743 = vunpack.c.l.b16 %v521
        %v744 = vunpack.c.l.b16 %v522
        %v745 = vunpack.c.l.b16 %v523
        %v746 = vunpack.c.l.b16 %v524
        %v747 = vunpack.c.l.b16 %v525
        %v748 = vunpack.c.l.b16 %v526
        %v749 = vunpack.c.l.b16 %v527
        %v750 = vunpack.c.l.b16 %v528
        %v751 = vunpack.c.l.b16 %v529
        %v752 = vunpack.c.l.b16 %v530
        %v753 = vunpack.c.l.b16 %v531
        %v754 = vunpack.c.l.b16 %v532
        %v755 = vunpack.c.l.b16 %v533
        %v756 = vunpack.c.l.b16 %v534
        %v757 = vunpack.c.l.b16 %v535
        %v758 = vunpack.c.l.b16 %v536
        %v759 = vunpack.c.l.b16 %v537
        %v760 = vunpack.c.l.b16 %v538
        %v761 = vunpack.c.l.b16 %v539
        %v762 = vunpack.c.l.b16 %v540
        %v763 = vpack.c.b16 %v668, %v667
        %v764 = vpack.c.b16 %v670, %v669
        %v765 = vpack.c.b16 %v672, %v671
        %v766 = vpack.c.b16 %v674, %v673
        %v767 = vpack.c.b16 %v676, %v675
        %v768 = vpack.c.b16 %v678, %v677
        %v769 = vpack.c.b16 %v680, %v679
        %v770 = vpack.c.b16 %v682, %v681
        %v771 = vpack.c.b16 %v684, %v683
        %v772 = vpack.c.b16 %v686, %v685
        %v773 = vpack.c.b16 %v688, %v687
        %v774 = vpack.c.b16 %v690, %v689
        %v775 = vpack.c.b16 %v692, %v691
        %v776 = vpack.c.b16 %v694, %v693
        %v777 = vpack.c.b16 %v696, %v695
        %v778 = vpack.c.b16 %v698, %v697
        %v779 = vpack.c.b16 %v700, %v699
        %v780 = vpack.c.b16 %v702, %v701
        %v781 = vpack.c.b16 %v704, %v703
        %v782 = vpack.c.b16 %v706, %v705
        %v783 = vpack.c.b16 %v708, %v707
        %v784 = vpack.c.b16 %v710, %v709
        %v785 = vpack.c.b16 %v712, %v711
        %v786 = vpack.c.b16 %v714, %v713
        %v787 = vpack.c.b16 %v716, %v715
        %v788 = vpack.c.b16 %v718, %v717
        %v789 = vpack.c.b16 %v720, %v719
        %v790 = vpack.c.b16 %v722, %v721
        %v791 = vpack.c.b16 %v724, %v723
        %v792 = vpack.c.b16 %v726, %v725
        %v793 = vpack.c.b16 %v728, %v727
        %v794 = vpack.c.b16 %v730, %v729
        %v795 = vpack.c.b16 %v732, %v731
        %v796 = vpack.c.b16 %v734, %v733
        %v797 = vpack.c.b16 %v736, %v735
        %v798 = vpack.c.b16 %v738, %v737
        %v799 = vpack.c.b16 %v740, %v739
        %v800 = vpack.c.b16 %v742, %v741
        %v801 = vpack.c.b16 %v744, %v743
        %v802 = vpack.c.b16 %v746, %v745
        %v803 = vpack.c.b16 %v748, %v747
        %v804 = vpack.c.b16 %v750, %v749
        %v805 = vpack.c.b16 %v752, %v751
        %v806 = vpack.c.b16 %v754, %v753
        %v807 = vpack.c.b16 %v756, %v755
        %v808 = vpack.c.b16 %v758, %v757
        %v809 = vpack.c.b16 %v760, %v759
        %v810 = vpack.c.b16 %v762, %v761
        %859 = vmatpush.bf16.msra.mxu0 %v770
        %860 = vmatpush.bf16.msra.mxu0 %v769
        %861 = vmatpush.bf16.msra.mxu0 %v768
        %862 = vmatpush.bf16.msra.mxu0 %v767
        %863 = vmatpush.bf16.msra.mxu0 %v766
        %864 = vmatpush.bf16.msra.mxu0 %v765
        %865 = vmatpush.bf16.msra.mxu0 %v764
        %866 = vmatpush.bf16.msra.mxu0 %v763
        %867 = vmatmul.bf16.gmra.mxu0 %v559
        %v868 = vpop.f32.mrf.mxu0
        %v869 = vadd.f32 0.0, %v868
        %v870 = vpop.f32.mrf.mxu0
        %v871 = vadd.f32 0.0, %v870
        %872 = vdwg.mxu0
        %873 = vmatpush.bf16.msra.mxu0 %v778
        %874 = vmatpush.bf16.msra.mxu0 %v777
        %875 = vmatpush.bf16.msra.mxu0 %v776
        %876 = vmatpush.bf16.msra.mxu0 %v775
        %877 = vmatpush.bf16.msra.mxu0 %v774
        %878 = vmatpush.bf16.msra.mxu0 %v773
        %879 = vmatpush.bf16.msra.mxu0 %v772
        %880 = vmatpush.bf16.msra.mxu0 %v771
        %881 = vmatmul.bf16.gmra.mxu0 %v560
        %v882 = vpop.f32.mrf.mxu0
        %v883 = vadd.f32 %v869, %v882
        %v884 = vpop.f32.mrf.mxu0
        %v885 = vadd.f32 %v871, %v884
        %886 = vdwg.mxu0
        %887 = vmatpush.bf16.msra.mxu0 %v786
        %888 = vmatpush.bf16.msra.mxu0 %v785
        %889 = vmatpush.bf16.msra.mxu0 %v784
        %890 = vmatpush.bf16.msra.mxu0 %v783
        %891 = vmatpush.bf16.msra.mxu0 %v782
        %892 = vmatpush.bf16.msra.mxu0 %v781
        %893 = vmatpush.bf16.msra.mxu0 %v780
        %894 = vmatpush.bf16.msra.mxu0 %v779
        %895 = vmatmul.bf16.gmra.mxu0 %v561
        %v896 = vpop.f32.mrf.mxu0
        %v897 = vadd.f32 %v883, %v896
        %v898 = vpop.f32.mrf.mxu0
        %v899 = vadd.f32 %v885, %v898
        %900 = vdwg.mxu0
        %901 = vmatpush.bf16.msra.mxu0 %v794
        %902 = vmatpush.bf16.msra.mxu0 %v793
        %903 = vmatpush.bf16.msra.mxu0 %v792
        %904 = vmatpush.bf16.msra.mxu0 %v791
        %905 = vmatpush.bf16.msra.mxu0 %v790
        %906 = vmatpush.bf16.msra.mxu0 %v789
        %907 = vmatpush.bf16.msra.mxu0 %v788
        %908 = vmatpush.bf16.msra.mxu0 %v787
        %909 = vmatmul.bf16.gmra.mxu0 %v562
        %v910 = vpop.f32.mrf.mxu0
        %v911 = vadd.f32 %v897, %v910
        %v912 = vpop.f32.mrf.mxu0
        %v913 = vadd.f32 %v899, %v912
        %914 = vdwg.mxu0
        %915 = vmatpush.bf16.msra.mxu0 %v802
        %916 = vmatpush.bf16.msra.mxu0 %v801
        %917 = vmatpush.bf16.msra.mxu0 %v800
        %918 = vmatpush.bf16.msra.mxu0 %v799
        %919 = vmatpush.bf16.msra.mxu0 %v798
        %920 = vmatpush.bf16.msra.mxu0 %v797
        %921 = vmatpush.bf16.msra.mxu0 %v796
        %922 = vmatpush.bf16.msra.mxu0 %v795
        %923 = vmatmul.bf16.gmra.mxu0 %v563
        %v924 = vpop.f32.mrf.mxu0
        %v925 = vadd.f32 %v911, %v924
        %v926 = vpop.f32.mrf.mxu0
        %v927 = vadd.f32 %v913, %v926
        %928 = vdwg.mxu0
        %929 = vmatpush.bf16.msra.mxu0 %v810
        %930 = vmatpush.bf16.msra.mxu0 %v809
        %931 = vmatpush.bf16.msra.mxu0 %v808
        %932 = vmatpush.bf16.msra.mxu0 %v807
        %933 = vmatpush.bf16.msra.mxu0 %v806
        %934 = vmatpush.bf16.msra.mxu0 %v805
        %935 = vmatpush.bf16.msra.mxu0 %v804
        %936 = vmatpush.bf16.msra.mxu0 %v803
        %937 = vmatmul.bf16.gmra.mxu0 %v564
        %v938 = vpop.f32.mrf.mxu0
        %v939 = vadd.f32 %v925, %v938
        %v940 = vpop.f32.mrf.mxu0
        %v941 = vadd.f32 %v927, %v940
        %942 = vdwg.mxu0
        %v943 = vadd.f32 %v437, %v939
        %v944 = vadd.f32 %v438, %v941
        %945 = vst [vmem:[#allocation2] sm:$0xff] %v943
        %946 = vst [vmem:[#allocation2 + $0x20] sm:$0xff] %v944
      $region48: #{forward.2} parent=39 // pred_fallthru
        _
      %p947 = scmp.ge.s32.totalorder %s21, 1
      // Predicated region
      $region49: #{forward.2} parent=39 // pred_check
        %p948 = pneg %p947
      $region50: #{forward.2} parent=39 // pred_check_branch
        %950 = sbr.rel (%p948) target = $region52
      $region51: #{forward.2} parent=39 // pred_region
        %v951 = vld [vmem:[#allocation2 + $0x8] sm:$0xff]
        %v952 = vld [vmem:[#allocation2 + $0x10] sm:$0xff]
        %v953 = vld [vmem:[#allocation2 + $0x18] sm:$0xff]
        %v954 = vld [vmem:[#allocation2 + $0x28] sm:$0xff]
        %v955 = vld [vmem:[#allocation2 + $0x30] sm:$0xff]
        %v956 = vld [vmem:[#allocation2 + $0x38] sm:$0xff]
        %v957 = vld [vmem:[%s376] sm:$0xf]
        %v958 = vld [vmem:[%s376 + $0x4] sm:$0xf]
        %v959 = vld [vmem:[%s399] sm:$0xff]
        %v960 = vld [vmem:[%s399 + $0x8] sm:$0xf]
        %v961 = vld [vmem:[%s399 + $0xc] sm:$0xff]
        %v962 = vld [vmem:[%s399 + $0x14] sm:$0xf]
        %v963 = vld [vmem:[%s399 + $0x18] sm:$0xff]
        %v964 = vld [vmem:[%s399 + $0x20] sm:$0xf]
        %v965 = vld [vmem:[%s399 + $0x24] sm:$0xff]
        %v966 = vld [vmem:[%s399 + $0x2c] sm:$0xf]
        %v967 = vld [vmem:[%s399 + $0x30] sm:$0xff]
        %v968 = vld [vmem:[%s399 + $0x38] sm:$0xf]
        %v969 = vld [vmem:[%s399 + $0x3c] sm:$0xff]
        %v970 = vld [vmem:[%s399 + $0x44] sm:$0xf]
        %v971 = vld [vmem:[%s399 + $0x48] sm:$0xff]
        %v972 = vld [vmem:[%s399 + $0x50] sm:$0xf]
        %v973 = vld [vmem:[%s399 + $0x54] sm:$0xff]
        %v974 = vld [vmem:[%s399 + $0x5c] sm:$0xf]
        %v975 = vld [vmem:[%s399 + $0x60] sm:$0xff]
        %v976 = vld [vmem:[%s399 + $0x68] sm:$0xf]
        %v977 = vld [vmem:[%s399 + $0x6c] sm:$0xff]
        %v978 = vld [vmem:[%s399 + $0x74] sm:$0xf]
        %v979 = vld [vmem:[%s399 + $0x78] sm:$0xff]
        %v980 = vld [vmem:[%s399 + $0x80] sm:$0xf]
        %v981 = vld [vmem:[%s399 + $0x84] sm:$0xff]
        %v982 = vld [vmem:[%s399 + $0x8c] sm:$0xf]
        %v983 = vld [vmem:[%s399 + $0x90] sm:$0xff]
        %v984 = vld [vmem:[%s399 + $0x98] sm:$0xf]
        %v985 = vld [vmem:[%s399 + $0x9c] sm:$0xff]
        %v986 = vld [vmem:[%s399 + $0xa4] sm:$0xf]
        %v987 = vld [vmem:[%s399 + $0xa8] sm:$0xff]
        %v988 = vld [vmem:[%s399 + $0xb0] sm:$0xf]
        %v989 = vld [vmem:[%s399 + $0xb4] sm:$0xff]
        %v990 = vld [vmem:[%s399 + $0xbc] sm:$0xf]
        %v993 = vunpack.c.l.b16 %v957
        %v994 = vunpack.c.l.b16 %v958
        %v995 = vpack.c.b16 %v994, %v993
        %v1029 = vunpack.c.l.b16 %v959
        %v1030 = vunpack.c.h.b16 %v959
        %v1031 = vunpack.c.l.b16 %v960
        %v1032 = vunpack.c.l.b16 %v961
        %v1033 = vunpack.c.h.b16 %v961
        %v1034 = vunpack.c.l.b16 %v962
        %v1035 = vunpack.c.l.b16 %v963
        %v1036 = vunpack.c.h.b16 %v963
        %v1037 = vunpack.c.l.b16 %v964
        %v1038 = vunpack.c.l.b16 %v965
        %v1039 = vunpack.c.h.b16 %v965
        %v1040 = vunpack.c.l.b16 %v966
        %v1041 = vunpack.c.l.b16 %v967
        %v1042 = vunpack.c.h.b16 %v967
        %v1043 = vunpack.c.l.b16 %v968
        %v1044 = vunpack.c.l.b16 %v969
        %v1045 = vunpack.c.h.b16 %v969
        %v1046 = vunpack.c.l.b16 %v970
        %v1047 = vunpack.c.l.b16 %v971
        %v1048 = vunpack.c.h.b16 %v971
        %v1049 = vunpack.c.l.b16 %v972
        %v1050 = vunpack.c.l.b16 %v973
        %v1051 = vunpack.c.h.b16 %v973
        %v1052 = vunpack.c.l.b16 %v974
        %v1053 = vunpack.c.l.b16 %v975
        %v1054 = vunpack.c.h.b16 %v975
        %v1055 = vunpack.c.l.b16 %v976
        %v1056 = vunpack.c.l.b16 %v977
        %v1057 = vunpack.c.h.b16 %v977
        %v1058 = vunpack.c.l.b16 %v978
        %v1059 = vunpack.c.l.b16 %v979
        %v1060 = vunpack.c.h.b16 %v979
        %v1061 = vunpack.c.l.b16 %v980
        %v1062 = vunpack.c.l.b16 %v981
        %v1063 = vunpack.c.h.b16 %v981
        %v1064 = vunpack.c.l.b16 %v982
        %v1065 = vunpack.c.l.b16 %v983
        %v1066 = vunpack.c.h.b16 %v983
        %v1067 = vunpack.c.l.b16 %v984
        %v1068 = vunpack.c.l.b16 %v985
        %v1069 = vunpack.c.h.b16 %v985
        %v1070 = vunpack.c.l.b16 %v986
        %v1071 = vunpack.c.l.b16 %v987
        %v1072 = vunpack.c.h.b16 %v987
        %v1073 = vunpack.c.l.b16 %v988
        %v1074 = vunpack.c.l.b16 %v989
        %v1075 = vunpack.c.h.b16 %v989
        %v1076 = vunpack.c.l.b16 %v990
        %v1077 = vpack.c.b16 %v1032, %v1029
        %v1078 = vpack.c.b16 %v1033, %v1030
        %v1079 = vpack.c.b16 %v1034, %v1031
        %v1080 = vpack.c.b16 %v1038, %v1035
        %v1081 = vpack.c.b16 %v1039, %v1036
        %v1082 = vpack.c.b16 %v1040, %v1037
        %v1083 = vpack.c.b16 %v1044, %v1041
        %v1084 = vpack.c.b16 %v1045, %v1042
        %v1085 = vpack.c.b16 %v1046, %v1043
        %v1086 = vpack.c.b16 %v1050, %v1047
        %v1087 = vpack.c.b16 %v1051, %v1048
        %v1088 = vpack.c.b16 %v1052, %v1049
        %v1089 = vpack.c.b16 %v1056, %v1053
        %v1090 = vpack.c.b16 %v1057, %v1054
        %v1091 = vpack.c.b16 %v1058, %v1055
        %v1092 = vpack.c.b16 %v1062, %v1059
        %v1093 = vpack.c.b16 %v1063, %v1060
        %v1094 = vpack.c.b16 %v1064, %v1061
        %v1095 = vpack.c.b16 %v1068, %v1065
        %v1096 = vpack.c.b16 %v1069, %v1066
        %v1097 = vpack.c.b16 %v1070, %v1067
        %v1098 = vpack.c.b16 %v1074, %v1071
        %v1099 = vpack.c.b16 %v1075, %v1072
        %v1100 = vpack.c.b16 %v1076, %v1073
        %1125 = vmatpush.bf16.msra.mxu0 %v1098
        %1126 = vmatpush.bf16.msra.mxu0 %v1095
        %1127 = vmatpush.bf16.msra.mxu0 %v1092
        %1128 = vmatpush.bf16.msra.mxu0 %v1089
        %1129 = vmatpush.bf16.msra.mxu0 %v1086
        %1130 = vmatpush.bf16.msra.mxu0 %v1083
        %1131 = vmatpush.bf16.msra.mxu0 %v1080
        %1132 = vmatpush.bf16.msra.mxu0 %v1077
        %1133 = vmatmul.bf16.gmra.mxu0 %v995
        %v1134 = vpop.f32.mrf.mxu0
        %v1135 = vadd.f32 0.0, %v1134
        %v1136 = vpop.f32.mrf.mxu0
        %v1137 = vadd.f32 0.0, %v1136
        %1138 = vdwg.mxu0
        %1139 = vmatpush.bf16.msra.mxu0 %v1099
        %1140 = vmatpush.bf16.msra.mxu0 %v1096
        %1141 = vmatpush.bf16.msra.mxu0 %v1093
        %1142 = vmatpush.bf16.msra.mxu0 %v1090
        %1143 = vmatpush.bf16.msra.mxu0 %v1087
        %1144 = vmatpush.bf16.msra.mxu0 %v1084
        %1145 = vmatpush.bf16.msra.mxu0 %v1081
        %1146 = vmatpush.bf16.msra.mxu0 %v1078
        %1147 = vmatmul.bf16.gmra.mxu0 %v995
        %v1148 = vpop.f32.mrf.mxu0
        %v1149 = vadd.f32 0.0, %v1148
        %v1150 = vpop.f32.mrf.mxu0
        %v1151 = vadd.f32 0.0, %v1150
        %1152 = vdwg.mxu0
        %1153 = vmatpush.bf16.msra.mxu0 %v1100
        %1154 = vmatpush.bf16.msra.mxu0 %v1097
        %1155 = vmatpush.bf16.msra.mxu0 %v1094
        %1156 = vmatpush.bf16.msra.mxu0 %v1091
        %1157 = vmatpush.bf16.msra.mxu0 %v1088
        %1158 = vmatpush.bf16.msra.mxu0 %v1085
        %1159 = vmatpush.bf16.msra.mxu0 %v1082
        %1160 = vmatpush.bf16.msra.mxu0 %v1079
        %1161 = vmatmul.bf16.gmra.mxu0 %v995
        %v1162 = vpop.f32.mrf.mxu0
        %v1163 = vadd.f32 0.0, %v1162
        %v1164 = vpop.f32.mrf.mxu0
        %v1165 = vadd.f32 0.0, %v1164
        %1166 = vdwg.mxu0
        %v1167 = vadd.f32 %v951, %v1135
        %v1168 = vadd.f32 %v952, %v1149
        %v1169 = vadd.f32 %v953, %v1163
        %v1170 = vadd.f32 %v954, %v1137
        %v1171 = vadd.f32 %v955, %v1151
        %v1172 = vadd.f32 %v956, %v1165
        %1173 = vst [vmem:[#allocation2 + $0x8] sm:$0xff] %v1167
        %1174 = vst [vmem:[#allocation2 + $0x10] sm:$0xff] %v1168
        %1175 = vst [vmem:[#allocation2 + $0x18] sm:$0xff] %v1169
        %1176 = vst [vmem:[#allocation2 + $0x28] sm:$0xff] %v1170
        %1177 = vst [vmem:[#allocation2 + $0x30] sm:$0xff] %v1171
        %1178 = vst [vmem:[#allocation2 + $0x38] sm:$0xff] %v1172
      $region52: #{forward.2} parent=39 // pred_fallthru
        _
      %p1179 = scmp.eq.s32.totalorder %s21, 1
      // Predicated region
      $region53: #{forward.2} parent=39 // pred_check
        %p1180 = pneg %p1179
      $region54: #{forward.2} parent=39 // pred_check_branch
        %1182 = sbr.rel (%p1180) target = $region56
      $region55: #{forward.2} parent=39 // pred_region
        %v1183 = vld [vmem:[#allocation2] sm:$0xff]
        %v1184 = vld [vmem:[#allocation2 + $0x8] sm:$0xff]
        %v1185 = vld [vmem:[#allocation2 + $0x10] sm:$0xff]
        %v1186 = vld [vmem:[#allocation2 + $0x18] sm:$0xff]
        %v1187 = vld [vmem:[#allocation2 + $0x20] sm:$0xff]
        %v1188 = vld [vmem:[#allocation2 + $0x28] sm:$0xff]
        %v1189 = vld [vmem:[#allocation2 + $0x30] sm:$0xff]
        %v1190 = vld [vmem:[#allocation2 + $0x38] sm:$0xff]
        %v1191 = vpack.c.bf16 %v1184, %v1183
        %v1192 = vpack.c.bf16 %v1186, %v1185
        %v1193 = vpack.c.bf16 %v1188, %v1187
        %v1194 = vpack.c.bf16 %v1190, %v1189
        %1195 = vst [vmem:[%s409] sm:$0xff] %v1191
        %1196 = vst [vmem:[%s409 + $0x8] sm:$0xff] %v1192
        %1197 = vst [vmem:[%s409 + $0x10] sm:$0xff] %v1193
        %1198 = vst [vmem:[%s409 + $0x18] sm:$0xff] %v1194
      $region56: #{forward.2} parent=39 // pred_fallthru
        _
      %s1199 = smul.u32 2, %s20
      %p1200 = scmp.lt.s32.totalorder %s1199, 1
      %s1201 = scalar_select %p1200, %s1199, 1
      %s1202 = smul.addr %s1201, 4
      %s1203 = smul.addr %s1202, 4
      %s1204 = scalar_lea.vmem %s5, %s1203
      // Predicated region
      $region57: #{forward.2} parent=39 // pred_check
        %p1205 = pneg %p195
      $region58: #{forward.2} parent=39 // pred_check_branch
        %1207 = sbr.rel (%p1205) target = $region60
      $region59: #{forward.2} parent=39 // pred_region
        %s1208 = smul.u32 2, %s20
      $region60: #{forward.2} parent=39 // pred_fallthru
        _
      // Predicated region
      $region61: #{forward.2} parent=39 // pred_check
        %p1209 = pneg %p195
      $region62: #{forward.2} parent=39 // pred_check_branch
        %1211 = sbr.rel (%p1209) target = $region64
      $region63: #{forward.2} parent=39 // pred_region
        %s1212 = smul.u32 2, %s20
        %p1213 = scmp.lt.s32.totalorder %s1212, 1
        %s1214 = scalar_select %p1213, %s1212, 1
        %s1215 = smul.addr %s1214, 4
        %s1216 = smul.addr %s1215, 4
        %s1217 = scalar_lea.vmem %s5, %s1216
      $region64: #{forward.2} parent=39 // pred_fallthru
        _
    $region40: #{forward.2} parent=5 // pred_fallthru
      _
    %p1218 = scmp.le.s32.totalorder 2, %s11
    // Predicated region
    $region65: #{forward.2} parent=5 // pred_check
      %p1219 = pneg %p1218
    $region66: #{forward.2} parent=5 // pred_check_branch
      %1221 = sbr.rel (%p1219) target = $region68
    $region67: #{forward.2} parent=5 // pred_region
      %s1222 = ssub.s32 %s11, 2
    $region68: #{forward.2} parent=5 // pred_fallthru
      _
  $region6: #{forward.2} parent=0 // loop_footer
    %s15 = sadd.s32 1, %s11
  $region7: #{forward.2} parent=0 // loop_footer_branch
    %10 = sbr.rel target = $region3
  $region8: #{forward.2} parent=0 // loop_exit
    _

</llo_original>
